<compile_context>
chip_gen: v7x
topology: tpu7x:2x2x1
jax: 0.10.0
libtpu: 0.0.40
codegen_flags: <defaults>
</compile_context>

<pallas_src>
import math

import jax
import jax.numpy as jnp
from jax.experimental import pallas as pl
from jax.experimental.pallas import tpu as pltpu


def make_gat_kernel(H, C, TM, neg_slope):
    """Masked-softmax attention + head aggregation + ReLU + Linear for one
    destination-row tile. All tile-invariant matmuls are hoisted to the wrapper."""
    neg_slope = float(neg_slope)          # Python floats -> jaxpr literals,
    inv_h = 1.0 / float(H)                # NOT captured array consts (prev bug).

    def kernel(a_src_ref,   # [H, N_pad]      f32  resident (att_src folded into W)
               a_dst_ref,   # [TM, H]         f32  per-tile (att_dst folded into W)
               e_ref,       # [H, TM, N_pad]  bf16 per-tile edge scores; -1e30 = no edge
               xw_ref,      # [H, N_pad, C]   bf16 resident projected messages
               bgat_ref,    # [1, C]          f32  resident GATConv bias
               wlin_ref,    # [C, O_pad]      f32  resident final linear (lane padded)
               blin_ref,    # [1, O_pad]      f32  resident final bias   (lane padded)
               out_ref):    # [TM, O_pad]     f32  per-tile output
        a_dst = a_dst_ref[...]                                    # [TM, H]
        acc = None
        for h in range(H):                                        # H static & small
            # scores[d, s] = a_dst[d, h] + a_src[h, s] + e[h, d, s]
            scores = (a_dst[:, h:h + 1]          # dest contribution (sublane bcast)
                      + a_src_ref[h:h + 1, :]    # source contribution (lane bcast)
                      + e_ref[h].astype(jnp.float32))             # [TM, N_pad]
            # leaky relu (non-edges stay ~-2e29 and vanish in the exp below)
            scores = jnp.where(scores >= 0.0, scores, neg_slope * scores)
            # masked softmax over incoming edges (mask baked into e as -1e30)
            row_max = jnp.max(scores, axis=1, keepdims=True)
            row_max = jnp.where(row_max < -1e20, 0.0, row_max)    # rows w/o edges
            p = jnp.exp(scores - row_max)                         # non-edges -> 0
            denom = jnp.sum(p, axis=1, keepdims=True)
            denom = jnp.where(denom == 0.0, 1.0, denom)
            p = p * (1.0 / denom)
            # per-head accumulating bf16 MXU matmul (sum over heads for free)
            contrib = jnp.dot(p.astype(jnp.bfloat16), xw_ref[h],
                              preferred_element_type=jnp.float32)  # [TM, C]
            acc = contrib if acc is None else acc + contrib

        # concat=False -> mean over heads, GATConv bias, ReLU, final Linear
        hdn = jnp.maximum(acc * inv_h + bgat_ref[...], 0.0)       # [TM, C]
        out_ref[...] = (jnp.dot(hdn, wlin_ref[...],
                                preferred_element_type=jnp.float32)
                        + blin_ref[...])                          # lane-dense store

    return kernel


def _vmem_cap_bytes():
    """Generation-dependent scoped-VMEM cap (v7x: 64 MiB phys, v5e/v6e: 128 MiB)."""
    try:
        kind = jax.devices()[0].device_kind.lower()
    except Exception:
        kind = ""
    if "v7" in kind:
        return 56 << 20
    if "v5" in kind or "v6" in kind:
        return 100 << 20
    return 48 << 20     # unknown backend: conservative, fits every generation


def gat_forward(x, edge_index, edge_attr, params, *, num_heads, hidden,
                out_channels, neg_slope=0.2, block_rows=256):
    """Full GATModel forward: GATConv (edge features, concat=False) -> ReLU
    -> Linear -> flatten."""
    x = x.astype(jnp.float32)
    edge_attr = edge_attr.astype(jnp.float32)
    N, Fin = x.shape
    Fe = edge_attr.shape[1]
    H, C, O = num_heads, hidden, out_channels

    # --- padding so the dst-row grid tiles cleanly and lanes are 128-dense ---
    TM = int(block_rows)
    assert TM % 16 == 0, "block_rows must be a multiple of 16 (bf16 sublane tiling)"
    step = math.lcm(TM, 128)
    N_pad = ((N + step - 1) // step) * step
    O_pad = 128                                        # lane-dense output stores
    G = N_pad // TM

    src, dst = edge_index[0], edge_index[1]

    # --- glue: add self loops (PyG default add_self_loops, fill_value='mean') ---
    # TODO(synk): PyG removes pre-existing self-loop edges before re-adding them;
    # graphs that already contain self-loops hit a slightly different edge case.
    sum_in = jnp.zeros((N, Fe), jnp.float32).at[dst].add(edge_attr)
    cnt_in = jnp.zeros((N,), jnp.float32).at[dst].add(1.0)
    mean_in = sum_in / jnp.maximum(cnt_in, 1.0)[:, None]
    loop_idx = jnp.arange(N)
    src_full = jnp.concatenate([src, loop_idx])
    dst_full = jnp.concatenate([dst, loop_idx])
    eattr_full = jnp.concatenate([edge_attr, mean_in], axis=0)

    # --- fold lin_edge with att_edge; dense per-head edge scores with the
    #     adjacency mask baked in (-1e30 for non-edges), shipped as bf16 ---
    we_att = jnp.einsum('fhc,hc->fh',
                        params['w_edge'].astype(jnp.float32).reshape(Fe, H, C),
                        params['att_edge'].astype(jnp.float32))     # [Fe, H]
    edge_scores = eattr_full @ we_att                               # [E_full, H]
    # TODO(synk): dense .set scatter dedupes parallel (duplicate) edges; PyG's
    # edge-list softmax would count them separately on multigraphs.
    e_dense = (jnp.full((H, N_pad, N_pad), -1e30, jnp.float32)
               .at[:, dst_full, src_full].set(edge_scores.T)
               ).astype(jnp.bfloat16)                               # [H, dst, src]

    # --- tile-invariant matmuls hoisted out of the kernel (plain XLA) ---
    w_resh = params['w'].astype(jnp.float32).reshape(Fin, H, C)
    att_src = params['att_src'].astype(jnp.float32)                 # [H, C]
    att_dst = params['att_dst'].astype(jnp.float32)                 # [H, C]
    x_pad = jnp.zeros((N_pad, Fin), jnp.float32).at[:N].set(x)

    xw = jnp.einsum('nf,fhc->hnc', x_pad, w_resh).astype(jnp.bfloat16)  # [H,N_pad,C]
    a_src = jnp.einsum('nf,fhc,hc->hn', x_pad, w_resh, att_src)         # [H, N_pad]
    a_dst = jnp.einsum('nf,fhc,hc->nh', x_pad, w_resh, att_dst)         # [N_pad, H]

    bgat = params['bias_gat'].astype(jnp.float32).reshape(1, C)
    wlin_pad = (jnp.zeros((C, O_pad), jnp.float32)
                .at[:, :O].set(params['w_lin'].astype(jnp.float32)))
    blin_pad = (jnp.zeros((1, O_pad), jnp.float32)
                .at[0, :O].set(params['b_lin'].astype(jnp.float32)))

    kernel = make_gat_kernel(H, C, TM, neg_slope)

    def resident(shape):
        r = len(shape)
        return pl.BlockSpec(shape, lambda i, r=r: (0,) * r)

    # NOTE: resident specs never re-DMA (constant index_map); pl.Buffered(1)
    # would halve their VMEM but they are tiny after hoisting, so left default.
    in_specs = [
        resident((H, N_pad)),                                       # a_src
        pl.BlockSpec((TM, H), lambda i: (i, 0)),                    # a_dst  (tiled)
        pl.BlockSpec((H, TM, N_pad), lambda i: (0, i, 0)),          # e_dense (tiled, bf16)
        resident((H, N_pad, C)),                                    # xw (bf16)
        resident((1, C)),                                           # bias_gat
        resident((C, O_pad)),                                       # w_lin padded
        resident((1, O_pad)),                                       # b_lin padded
    ]
    out_spec = pl.BlockSpec((TM, O_pad), lambda i: (i, 0))

    flops = G * (2 * TM * H * N_pad * C             # per-head aggregation matmuls
                 + 2 * TM * C * O_pad               # final linear
                 + 8 * H * TM * N_pad)              # softmax elementwise
    cost = pl.CostEstimate(
        flops=int(flops),
        transcendentals=int(H * N_pad * N_pad + G * TM),
        bytes_accessed=int(2 * H * N_pad * N_pad            # bf16 edge-score stream
                           + 4 * N_pad * (H + O_pad)        # a_dst in, out slab
                           + 2 * H * N_pad * C              # resident xw
                           + 4 * (H * N_pad + C + C * O_pad + O_pad)))

    # VMEM budget: double-buffered per-tile slabs + resident params + temps.
    per_tile = 2 * H * TM * N_pad + 4 * TM * H + 4 * TM * O_pad
    resident_b = 2 * H * N_pad * C + 4 * (H * N_pad + C + C * O_pad + O_pad)
    temps = 4 * 4 * TM * N_pad + 4 * TM * C
    vmem_limit = int(min(_vmem_cap_bytes(),
                         max(16 << 20,
                             2 * (per_tile + resident_b) + temps + (2 << 20))))

    out = pl.pallas_call(
        kernel,
        out_shape=jax.ShapeDtypeStruct((N_pad, O_pad), jnp.float32),
        grid=(G,),
        in_specs=in_specs,
        out_specs=out_spec,
        compiler_params=pltpu.CompilerParams(
            dimension_semantics=("parallel",),      # shards dst tiles across TCs
            vmem_limit_bytes=vmem_limit),
        cost_estimate=cost,
    )(a_src, a_dst, e_dense, xw, bgat, wlin_pad, blin_pad)

    return out[:N, :O].reshape(-1)   # x.view(-1)


if __name__ == "__main__":
    # Small synthetic problem:
    #   num_node_features=8, num_edge_features=4, num_heads=2,
    #   dim_hidden_layers=[32], output_node_channels=3, activation='relu',
    #   dropout=0, standardize=False  -> one GATConv layer + Linear.
    N, Fin, Fe, H, C, O = 16, 8, 4, 2, 32, 3

    key = jax.random.PRNGKey(0)
    ks = jax.random.split(key, 10)

    x = jax.random.normal(ks[0], (N, Fin), jnp.float32)

    # bidirectional ring graph (no duplicate edges, no self loops)
    idx = jnp.arange(N)
    src = jnp.concatenate([idx, (idx + 1) % N])
    dst = jnp.concatenate([(idx + 1) % N, idx])
    edge_index = jnp.stack([src, dst]).astype(jnp.int32)     # [2, E]
    E = edge_index.shape[1]
    edge_attr = jax.random.normal(ks[1], (E, Fe), jnp.float32)

    # deterministic synthetic parameters (PyG GATConv + final Linear shapes)
    params = dict(
        w=jax.random.normal(ks[2], (Fin, H * C), jnp.float32) * 0.1,      # lin (no bias)
        att_src=jax.random.normal(ks[3], (H, C), jnp.float32) * 0.1,
        att_dst=jax.random.normal(ks[4], (H, C), jnp.float32) * 0.1,
        w_edge=jax.random.normal(ks[5], (Fe, H * C), jnp.float32) * 0.1,  # lin_edge (no bias)
        att_edge=jax.random.normal(ks[6], (H, C), jnp.float32) * 0.1,
        bias_gat=jax.random.normal(ks[7], (C,), jnp.float32) * 0.1,
        w_lin=jax.random.normal(ks[8], (C, O), jnp.float32) * 0.1,
        b_lin=jax.random.normal(ks[9], (O,), jnp.float32) * 0.1,
    )

    # TODO(synk): dropout (p=0.0) and BatchNorm (standardize=False) are inactive
    # in this configuration and therefore not implemented in the kernel.
    out = gat_forward(x, edge_index, edge_attr, params,
                      num_heads=H, hidden=C, out_channels=O,
                      neg_slope=0.2, block_rows=64)   # block_rows=64 -> grid=(2,)
    jax.block_until_ready(out)
    assert out.shape == (N * O,)
    assert bool(jnp.all(jnp.isfinite(out)))
    print("KERNEL_OK")
</pallas_src>

<mosaic_0001>
module attributes {stable_mosaic.version = 11 : i64} {
  func.func @kernel(%arg0: i32, %arg1: memref<2x128xf32, #tpu.memory_space<vmem>>, %arg2: memref<64x2xf32, #tpu.memory_space<vmem>>, %arg3: memref<2x64x128xbf16, #tpu.memory_space<vmem>>, %arg4: memref<2x128x32xbf16, #tpu.memory_space<vmem>>, %arg5: memref<1x32xf32, #tpu.memory_space<vmem>>, %arg6: memref<32x128xf32, #tpu.memory_space<vmem>>, %arg7: memref<1x128xf32, #tpu.memory_space<vmem>>, %arg8: memref<64x128xf32, #tpu.memory_space<vmem>>) attributes {dimension_semantics = [#tpu.dimension_semantics<parallel>], iteration_bounds = array<i64: 2>, scalar_prefetch = 0 : i64, scratch_operands = 0 : i64, tpu.core_type = #tpu.core_type<tc>, window_params = [{pipeline_mode = #tpu.pipeline_mode<synchronous>, transform_indices = @transform_0, window_bounds = array<i64: 2, 128>}, {transform_indices = @transform_1, window_bounds = array<i64: 64, 2>}, {transform_indices = @transform_2, window_bounds = array<i64: 2, 64, 128>}, {pipeline_mode = #tpu.pipeline_mode<synchronous>, transform_indices = @transform_3, window_bounds = array<i64: 2, 128, 32>}, {pipeline_mode = #tpu.pipeline_mode<synchronous>, transform_indices = @transform_4, window_bounds = array<i64: 1, 32>}, {pipeline_mode = #tpu.pipeline_mode<synchronous>, transform_indices = @transform_5, window_bounds = array<i64: 32, 128>}, {pipeline_mode = #tpu.pipeline_mode<synchronous>, transform_indices = @transform_6, window_bounds = array<i64: 1, 128>}, {transform_indices = @transform_7, window_bounds = array<i64: 64, 128>}]} {
    %c0 = arith.constant 0 : index
    %c0_0 = arith.constant 0 : index
    %0 = vector.load %arg2[%c0, %c0_0] : memref<64x2xf32, #tpu.memory_space<vmem>>, vector<64x2xf32>
    %1 = vector.extract_strided_slice %0 {offsets = [0, 0], sizes = [64, 1], strides = [1, 1]} : vector<64x2xf32> to vector<64x1xf32>
    %c0_1 = arith.constant 0 : index
    %c0_2 = arith.constant 0 : index
    %2 = vector.load %arg1[%c0_1, %c0_2] : memref<2x128xf32, #tpu.memory_space<vmem>>, vector<1x128xf32>
    %3 = vector.broadcast %1 : vector<64x1xf32> to vector<64x128xf32>
    %4 = vector.broadcast %2 : vector<1x128xf32> to vector<64x128xf32>
    %5 = arith.addf %3, %4 : vector<64x128xf32>
    %c0_3 = arith.constant 0 : index
    %c0_4 = arith.constant 0 : index
    %c0_5 = arith.constant 0 : index
    %6 = vector.load %arg3[%c0_3, %c0_4, %c0_5] : memref<2x64x128xbf16, #tpu.memory_space<vmem>>, vector<1x64x128xbf16>
    %7 = vector.shape_cast %6 : vector<1x64x128xbf16> to vector<64x128xbf16>
    %8 = arith.extf %7 : vector<64x128xbf16> to vector<64x128xf32>
    %9 = arith.addf %5, %8 : vector<64x128xf32>
    %cst = arith.constant 0.000000e+00 : f32
    %10 = vector.broadcast %cst : f32 to vector<64x128xf32>
    %11 = arith.cmpf oge, %9, %10 : vector<64x128xf32>
    %cst_6 = arith.constant 2.000000e-01 : f32
    %12 = vector.broadcast %cst_6 : f32 to vector<64x128xf32>
    %13 = arith.mulf %12, %9 : vector<64x128xf32>
    %14 = arith.select %11, %9, %13 : vector<64x128xi1>, vector<64x128xf32>
    %cst_7 = arith.constant dense<0xFF800000> : vector<64xf32>
    %15 = vector.multi_reduction <maximumf>, %14, %cst_7 [1] : vector<64x128xf32> to vector<64xf32>
    %16 = vector.shape_cast %15 : vector<64xf32> to vector<64x1xf32>
    %cst_8 = arith.constant -1.000000e+20 : f32
    %17 = vector.broadcast %cst_8 : f32 to vector<64x1xf32>
    %18 = arith.cmpf olt, %16, %17 : vector<64x1xf32>
    %cst_9 = arith.constant 0.000000e+00 : f32
    %19 = vector.broadcast %cst_9 : f32 to vector<64x1xf32>
    %20 = arith.select %18, %19, %16 : vector<64x1xi1>, vector<64x1xf32>
    %21 = vector.broadcast %20 : vector<64x1xf32> to vector<64x128xf32>
    %22 = arith.subf %14, %21 : vector<64x128xf32>
    %23 = math.exp %22 : vector<64x128xf32>
    %cst_10 = arith.constant dense<0.000000e+00> : vector<64xf32>
    %24 = vector.multi_reduction <add>, %23, %cst_10 [1] : vector<64x128xf32> to vector<64xf32>
    %25 = vector.shape_cast %24 : vector<64xf32> to vector<64x1xf32>
    %cst_11 = arith.constant 0.000000e+00 : f32
    %26 = vector.broadcast %cst_11 : f32 to vector<64x1xf32>
    %27 = arith.cmpf oeq, %25, %26 : vector<64x1xf32>
    %cst_12 = arith.constant 1.000000e+00 : f32
    %28 = vector.broadcast %cst_12 : f32 to vector<64x1xf32>
    %29 = arith.select %27, %28, %25 : vector<64x1xi1>, vector<64x1xf32>
    %cst_13 = arith.constant 1.000000e+00 : f32
    %30 = vector.broadcast %cst_13 : f32 to vector<64x1xf32>
    %31 = arith.divf %30, %29 : vector<64x1xf32>
    %32 = vector.broadcast %31 : vector<64x1xf32> to vector<64x128xf32>
    %33 = arith.mulf %23, %32 : vector<64x128xf32>
    %34 = arith.truncf %33 : vector<64x128xf32> to vector<64x128xbf16>
    %c0_14 = arith.constant 0 : index
    %c0_15 = arith.constant 0 : index
    %c0_16 = arith.constant 0 : index
    %35 = vector.load %arg4[%c0_14, %c0_15, %c0_16] : memref<2x128x32xbf16, #tpu.memory_space<vmem>>, vector<1x128x32xbf16>
    %36 = vector.shape_cast %35 : vector<1x128x32xbf16> to vector<128x32xbf16>
    %cst_17 = arith.constant dense<0.000000e+00> : vector<64x32xf32>
    %37 = tpu.matmul %34, %36, %cst_17 {dimension_numbers = #tpu.dot_dimension_numbers<[1], [0], [0], [1], [0, 0, 1, 1], [], []>} : vector<64x128xbf16>, vector<128x32xbf16>, vector<64x32xf32> -> vector<64x32xf32>
    %38 = vector.extract_strided_slice %0 {offsets = [0, 1], sizes = [64, 1], strides = [1, 1]} : vector<64x2xf32> to vector<64x1xf32>
    %c1 = arith.constant 1 : index
    %c0_18 = arith.constant 0 : index
    %39 = vector.load %arg1[%c1, %c0_18] : memref<2x128xf32, #tpu.memory_space<vmem>>, vector<1x128xf32>
    %40 = vector.broadcast %38 : vector<64x1xf32> to vector<64x128xf32>
    %41 = vector.broadcast %39 : vector<1x128xf32> to vector<64x128xf32>
    %42 = arith.addf %40, %41 : vector<64x128xf32>
    %c1_19 = arith.constant 1 : index
    %c0_20 = arith.constant 0 : index
    %c0_21 = arith.constant 0 : index
    %43 = vector.load %arg3[%c1_19, %c0_20, %c0_21] : memref<2x64x128xbf16, #tpu.memory_space<vmem>>, vector<1x64x128xbf16>
    %44 = vector.shape_cast %43 : vector<1x64x128xbf16> to vector<64x128xbf16>
    %45 = arith.extf %44 : vector<64x128xbf16> to vector<64x128xf32>
    %46 = arith.addf %42, %45 : vector<64x128xf32>
    %cst_22 = arith.constant 0.000000e+00 : f32
    %47 = vector.broadcast %cst_22 : f32 to vector<64x128xf32>
    %48 = arith.cmpf oge, %46, %47 : vector<64x128xf32>
    %cst_23 = arith.constant 2.000000e-01 : f32
    %49 = vector.broadcast %cst_23 : f32 to vector<64x128xf32>
    %50 = arith.mulf %49, %46 : vector<64x128xf32>
    %51 = arith.select %48, %46, %50 : vector<64x128xi1>, vector<64x128xf32>
    %cst_24 = arith.constant dense<0xFF800000> : vector<64xf32>
    %52 = vector.multi_reduction <maximumf>, %51, %cst_24 [1] : vector<64x128xf32> to vector<64xf32>
    %53 = vector.shape_cast %52 : vector<64xf32> to vector<64x1xf32>
    %cst_25 = arith.constant -1.000000e+20 : f32
    %54 = vector.broadcast %cst_25 : f32 to vector<64x1xf32>
    %55 = arith.cmpf olt, %53, %54 : vector<64x1xf32>
    %cst_26 = arith.constant 0.000000e+00 : f32
    %56 = vector.broadcast %cst_26 : f32 to vector<64x1xf32>
    %57 = arith.select %55, %56, %53 : vector<64x1xi1>, vector<64x1xf32>
    %58 = vector.broadcast %57 : vector<64x1xf32> to vector<64x128xf32>
    %59 = arith.subf %51, %58 : vector<64x128xf32>
    %60 = math.exp %59 : vector<64x128xf32>
    %cst_27 = arith.constant dense<0.000000e+00> : vector<64xf32>
    %61 = vector.multi_reduction <add>, %60, %cst_27 [1] : vector<64x128xf32> to vector<64xf32>
    %62 = vector.shape_cast %61 : vector<64xf32> to vector<64x1xf32>
    %cst_28 = arith.constant 0.000000e+00 : f32
    %63 = vector.broadcast %cst_28 : f32 to vector<64x1xf32>
    %64 = arith.cmpf oeq, %62, %63 : vector<64x1xf32>
    %cst_29 = arith.constant 1.000000e+00 : f32
    %65 = vector.broadcast %cst_29 : f32 to vector<64x1xf32>
    %66 = arith.select %64, %65, %62 : vector<64x1xi1>, vector<64x1xf32>
    %cst_30 = arith.constant 1.000000e+00 : f32
    %67 = vector.broadcast %cst_30 : f32 to vector<64x1xf32>
    %68 = arith.divf %67, %66 : vector<64x1xf32>
    %69 = vector.broadcast %68 : vector<64x1xf32> to vector<64x128xf32>
    %70 = arith.mulf %60, %69 : vector<64x128xf32>
    %71 = arith.truncf %70 : vector<64x128xf32> to vector<64x128xbf16>
    %c1_31 = arith.constant 1 : index
    %c0_32 = arith.constant 0 : index
    %c0_33 = arith.constant 0 : index
    %72 = vector.load %arg4[%c1_31, %c0_32, %c0_33] : memref<2x128x32xbf16, #tpu.memory_space<vmem>>, vector<1x128x32xbf16>
    %73 = vector.shape_cast %72 : vector<1x128x32xbf16> to vector<128x32xbf16>
    %cst_34 = arith.constant dense<0.000000e+00> : vector<64x32xf32>
    %74 = tpu.matmul %71, %73, %cst_34 {dimension_numbers = #tpu.dot_dimension_numbers<[1], [0], [0], [1], [0, 0, 1, 1], [], []>} : vector<64x128xbf16>, vector<128x32xbf16>, vector<64x32xf32> -> vector<64x32xf32>
    %75 = arith.addf %37, %74 : vector<64x32xf32>
    %cst_35 = arith.constant 5.000000e-01 : f32
    %76 = vector.broadcast %cst_35 : f32 to vector<64x32xf32>
    %77 = arith.mulf %75, %76 : vector<64x32xf32>
    %c0_36 = arith.constant 0 : index
    %c0_37 = arith.constant 0 : index
    %78 = vector.load %arg5[%c0_36, %c0_37] : memref<1x32xf32, #tpu.memory_space<vmem>>, vector<1x32xf32>
    %79 = vector.broadcast %78 : vector<1x32xf32> to vector<64x32xf32>
    %80 = arith.addf %77, %79 : vector<64x32xf32>
    %cst_38 = arith.constant 0.000000e+00 : f32
    %81 = vector.broadcast %cst_38 : f32 to vector<64x32xf32>
    %82 = arith.maximumf %80, %81 : vector<64x32xf32>
    %c0_39 = arith.constant 0 : index
    %c0_40 = arith.constant 0 : index
    %83 = vector.load %arg6[%c0_39, %c0_40] : memref<32x128xf32, #tpu.memory_space<vmem>>, vector<32x128xf32>
    %cst_41 = arith.constant dense<0.000000e+00> : vector<64x128xf32>
    %84 = tpu.matmul %82, %83, %cst_41 {dimension_numbers = #tpu.dot_dimension_numbers<[1], [0], [0], [1], [0, 0, 1, 1], [], []>} : vector<64x32xf32>, vector<32x128xf32>, vector<64x128xf32> -> vector<64x128xf32>
    %c0_42 = arith.constant 0 : index
    %c0_43 = arith.constant 0 : index
    %85 = vector.load %arg7[%c0_42, %c0_43] : memref<1x128xf32, #tpu.memory_space<vmem>>, vector<1x128xf32>
    %86 = vector.broadcast %85 : vector<1x128xf32> to vector<64x128xf32>
    %87 = arith.addf %84, %86 : vector<64x128xf32>
    %c0_44 = arith.constant 0 : index
    %c0_45 = arith.constant 0 : index
    %88 = vector.load %arg8[%c0_44, %c0_45] : memref<64x128xf32, #tpu.memory_space<vmem>>, vector<64x128xf32>
    tpu.vector_store %arg8[%c0_44, %c0_45], %87 {strides = array<i32>} : memref<64x128xf32, #tpu.memory_space<vmem>>, vector<64x128xf32>,
    return
  }
  func.func @transform_0(%arg0: i32) -> (i32, i32) {
    %c0_i32 = arith.constant 0 : i32
    %c0_i32_0 = arith.constant 0 : i32
    %c0_i32_1 = arith.constant 0 : i32
    return %c0_i32, %c0_i32_0 : i32, i32
  }
  func.func @transform_1(%arg0: i32) -> (i32, i32) {
    %c0_i32 = arith.constant 0 : i32
    %c0_i32_0 = arith.constant 0 : i32
    return %arg0, %c0_i32 : i32, i32
  }
  func.func @transform_2(%arg0: i32) -> (i32, i32, i32) {
    %c0_i32 = arith.constant 0 : i32
    %c0_i32_0 = arith.constant 0 : i32
    %c0_i32_1 = arith.constant 0 : i32
    return %c0_i32, %arg0, %c0_i32_0 : i32, i32, i32
  }
  func.func @transform_3(%arg0: i32) -> (i32, i32, i32) {
    %c0_i32 = arith.constant 0 : i32
    %c0_i32_0 = arith.constant 0 : i32
    %c0_i32_1 = arith.constant 0 : i32
    %c0_i32_2 = arith.constant 0 : i32
    return %c0_i32, %c0_i32_0, %c0_i32_1 : i32, i32, i32
  }
  func.func @transform_4(%arg0: i32) -> (i32, i32) {
    %c0_i32 = arith.constant 0 : i32
    %c0_i32_0 = arith.constant 0 : i32
    %c0_i32_1 = arith.constant 0 : i32
    return %c0_i32, %c0_i32_0 : i32, i32
  }
  func.func @transform_5(%arg0: i32) -> (i32, i32) {
    %c0_i32 = arith.constant 0 : i32
    %c0_i32_0 = arith.constant 0 : i32
    %c0_i32_1 = arith.constant 0 : i32
    return %c0_i32, %c0_i32_0 : i32, i32
  }
  func.func @transform_6(%arg0: i32) -> (i32, i32) {
    %c0_i32 = arith.constant 0 : i32
    %c0_i32_0 = arith.constant 0 : i32
    %c0_i32_1 = arith.constant 0 : i32
    return %c0_i32, %c0_i32_0 : i32, i32
  }
  func.func @transform_7(%arg0: i32) -> (i32, i32) {
    %c0_i32 = arith.constant 0 : i32
    %c0_i32_0 = arith.constant 0 : i32
    return %arg0, %c0_i32 : i32, i32
  }
}

</mosaic_0001>

<llo_original>
// kernel: tpu_custom_call.1
$region0: #{tpu_custom_call.1}
  #allocation0 [shape = 'u32[]', space=smem, size = 0x4, offset = 0x4, fixed_abs, tag = 'smem constant byte address 0x4 - core index']
  #allocation1 [shape = 'u32[144,128]{1,0:T(1,128)}', space=vmem, size = 0x12000, scoped, tag = 'internal scratch']
  %s0 = inlined_call_operand.vmem [shape: f32[2,128], index: 0, kind: input, shape index: {}]
  %s1 = inlined_call_operand.vmem [shape: f32[128,2], index: 1, kind: input, shape index: {}]
  %s2 = inlined_call_operand.vmem [shape: bf16[2,128,128], index: 2, kind: input, shape index: {}]
  %s3 = inlined_call_operand.vmem [shape: bf16[2,128,32], index: 3, kind: input, shape index: {}]
  %s4 = inlined_call_operand.vmem [shape: f32[1,32], index: 4, kind: input, shape index: {}]
  %s5 = inlined_call_operand.vmem [shape: f32[32,128], index: 5, kind: input, shape index: {}]
  %s6 = inlined_call_operand.vmem [shape: f32[1,128], index: 6, kind: input, shape index: {}]
  %s7 = inlined_call_operand.hbm [shape: f32[128,128], index: 7, kind: output, shape index: {}]
  %s8 = sld [smem:[#allocation0]]
  $region102: #{tpu_custom_call.1} parent=0
    _
  %s10 = ssub.s32 1, %s8
  %s11 = scalar_select 0, %s10, %s8
  $region1: #{tpu_custom_call.1} parent=0
    #allocation2 [shape = 'u8[65536]{0}', space=vmem, size = 0x10000, scoped, tag = 'input window, operand 2']
    #allocation3 [shape = 'u8[65536]{0}', space=vmem, size = 0x10000, scoped, tag = 'output window, operand 0']
    #allocation4 [shape = 's32[2]{0}', space=sflag, size = 0x8, scoped, tag = 'scoped memory for tpu_custom_call.1']
    %12 = vsyncpa [#allocation4], 0
    %s13 = scalar_lea.sflag [#allocation4], 1
    %14 = vsyncpa %s13, 0
    loop: start=0, step=1, limit=4
    $region2: #{tpu_custom_call.1} parent=1 // loop_pre_header
      _
    $region3: #{tpu_custom_call.1} parent=1 // loop_header
      %s16 = sphi 0, %s20
      %p17 = scmp.ge.s32.totalorder %s16, 4
      %s24 = sphi 0, %s24
      %s26 = sphi 0, %s24
      %s27 = sphi 0, %s26
      %s41 = sphi 0, %s27
      %s47 = sphi 0, %s49
      %s50 = sphi 0, %s47
      %s51 = sphi 0, %s50
      %s67 = sphi 0, %s51
      %s73 = sphi 0, %s75
      %s76 = sphi 0, %s73
      %s77 = sphi 0, %s76
      %s93 = sphi 0, %s77
      %s97 = sphi 0, %s97
      %s99 = sphi 0, %s97
      %s100 = sphi 0, %s99
      %s114 = sphi 0, %s100
      %s118 = sphi 0, %s118
      %s120 = sphi 0, %s118
      %s121 = sphi 0, %s120
      %s135 = sphi 0, %s121
      %s139 = sphi 0, %s139
      %s141 = sphi 0, %s139
      %s142 = sphi 0, %s141
      %s156 = sphi 0, %s142
      %s160 = sphi 0, %s160
      %s162 = sphi 0, %s160
      %s163 = sphi 0, %s162
      %s177 = sphi 0, %s163
      %s183 = sphi 0, %s185
      %s186 = sphi 0, %s183
      %s187 = sphi 0, %s186
      %s203 = sphi 0, %s187
    $region4: #{tpu_custom_call.1} parent=1 // loop_header_branch
      %19 = sbr.rel (%p17) target = $region8
    $region5: #{tpu_custom_call.1} parent=1 // loop_body
      %s21 = ssub.s32 %s16, 1
      %s22 = ssub.s32 %s16, 2
      %s23 = sadd.s32 %s16, 1
      %s25 = sadd.s32 %s24, 1
      %p28 = scmp.eq.s32.totalorder %s16, 1
      %p29 = scmp.ne.s32.totalorder %s24, %s26
      %p30 = scmp.eq.s32.totalorder %s16, 0
      %p31 = por %p29, %p30
      %p32 = scmp.ne.s32.totalorder %s24, %s26
      %p33 = scmp.eq.s32.totalorder %s21, 1
      %p34 = por %p32, %p33
      %p35 = scmp.ne.s32.totalorder %s26, %s27
      %p36 = scmp.eq.s32.totalorder %s21, 0
      %p37 = por %p35, %p36
      %p38 = scmp.ne.s32.totalorder %s26, %s27
      %p39 = scmp.eq.s32.totalorder %s22, 1
      %p40 = por %p38, %p39
      %p42 = scmp.ne.s32.totalorder %s27, %s41
      %p43 = scmp.eq.s32.totalorder %s22, 0
      %p44 = por %p42, %p43
      %s45 = ssub.s32 %s16, %s23
      %p46 = scmp.eq.s32.totalorder %s45, 0
      %s48 = sadd.s32 %s47, 1
      %s49 = scalar_select %p46, %s47, %s48
      %p52 = pneg %p46
      %p53 = scmp.eq.s32.totalorder %s16, 1
      %p54 = por %p52, %p53
      %p55 = scmp.ne.s32.totalorder %s47, %s50
      %p56 = scmp.eq.s32.totalorder %s16, 0
      %p57 = por %p55, %p56
      %p58 = scmp.ne.s32.totalorder %s47, %s50
      %p59 = scmp.eq.s32.totalorder %s21, 1
      %p60 = por %p58, %p59
      %p61 = scmp.ne.s32.totalorder %s50, %s51
      %p62 = scmp.eq.s32.totalorder %s21, 0
      %p63 = por %p61, %p62
      %p64 = scmp.ne.s32.totalorder %s50, %s51
      %p65 = scmp.eq.s32.totalorder %s22, 1
      %p66 = por %p64, %p65
      %p68 = scmp.ne.s32.totalorder %s51, %s67
      %p69 = scmp.eq.s32.totalorder %s22, 0
      %p70 = por %p68, %p69
      %s71 = ssub.s32 %s16, %s23
      %p72 = scmp.eq.s32.totalorder %s71, 0
      %s74 = sadd.s32 %s73, 1
      %s75 = scalar_select %p72, %s73, %s74
      %p78 = pneg %p72
      %p79 = scmp.eq.s32.totalorder %s16, 1
      %p80 = por %p78, %p79
      %p81 = scmp.ne.s32.totalorder %s73, %s76
      %p82 = scmp.eq.s32.totalorder %s16, 0
      %p83 = por %p81, %p82
      %p84 = scmp.ne.s32.totalorder %s73, %s76
      %p85 = scmp.eq.s32.totalorder %s21, 1
      %p86 = por %p84, %p85
      %p87 = scmp.ne.s32.totalorder %s76, %s77
      %p88 = scmp.eq.s32.totalorder %s21, 0
      %p89 = por %p87, %p88
      %p90 = scmp.ne.s32.totalorder %s76, %s77
      %p91 = scmp.eq.s32.totalorder %s22, 1
      %p92 = por %p90, %p91
      %p94 = scmp.ne.s32.totalorder %s77, %s93
      %p95 = scmp.eq.s32.totalorder %s22, 0
      %p96 = por %p94, %p95
      %s98 = sadd.s32 %s97, 1
      %p101 = scmp.eq.s32.totalorder %s16, 1
      %p102 = scmp.ne.s32.totalorder %s97, %s99
      %p103 = scmp.eq.s32.totalorder %s16, 0
      %p104 = por %p102, %p103
      %p105 = scmp.ne.s32.totalorder %s97, %s99
      %p106 = scmp.eq.s32.totalorder %s21, 1
      %p107 = por %p105, %p106
      %p108 = scmp.ne.s32.totalorder %s99, %s100
      %p109 = scmp.eq.s32.totalorder %s21, 0
      %p110 = por %p108, %p109
      %p111 = scmp.ne.s32.totalorder %s99, %s100
      %p112 = scmp.eq.s32.totalorder %s22, 1
      %p113 = por %p111, %p112
      %p115 = scmp.ne.s32.totalorder %s100, %s114
      %p116 = scmp.eq.s32.totalorder %s22, 0
      %p117 = por %p115, %p116
      %s119 = sadd.s32 %s118, 1
      %p122 = scmp.eq.s32.totalorder %s16, 1
      %p123 = scmp.ne.s32.totalorder %s118, %s120
      %p124 = scmp.eq.s32.totalorder %s16, 0
      %p125 = por %p123, %p124
      %p126 = scmp.ne.s32.totalorder %s118, %s120
      %p127 = scmp.eq.s32.totalorder %s21, 1
      %p128 = por %p126, %p127
      %p129 = scmp.ne.s32.totalorder %s120, %s121
      %p130 = scmp.eq.s32.totalorder %s21, 0
      %p131 = por %p129, %p130
      %p132 = scmp.ne.s32.totalorder %s120, %s121
      %p133 = scmp.eq.s32.totalorder %s22, 1
      %p134 = por %p132, %p133
      %p136 = scmp.ne.s32.totalorder %s121, %s135
      %p137 = scmp.eq.s32.totalorder %s22, 0
      %p138 = por %p136, %p137
      %s140 = sadd.s32 %s139, 1
      %p143 = scmp.eq.s32.totalorder %s16, 1
      %p144 = scmp.ne.s32.totalorder %s139, %s141
      %p145 = scmp.eq.s32.totalorder %s16, 0
      %p146 = por %p144, %p145
      %p147 = scmp.ne.s32.totalorder %s139, %s141
      %p148 = scmp.eq.s32.totalorder %s21, 1
      %p149 = por %p147, %p148
      %p150 = scmp.ne.s32.totalorder %s141, %s142
      %p151 = scmp.eq.s32.totalorder %s21, 0
      %p152 = por %p150, %p151
      %p153 = scmp.ne.s32.totalorder %s141, %s142
      %p154 = scmp.eq.s32.totalorder %s22, 1
      %p155 = por %p153, %p154
      %p157 = scmp.ne.s32.totalorder %s142, %s156
      %p158 = scmp.eq.s32.totalorder %s22, 0
      %p159 = por %p157, %p158
      %s161 = sadd.s32 %s160, 1
      %p164 = scmp.eq.s32.totalorder %s16, 1
      %p165 = scmp.ne.s32.totalorder %s160, %s162
      %p166 = scmp.eq.s32.totalorder %s16, 0
      %p167 = por %p165, %p166
      %p168 = scmp.ne.s32.totalorder %s160, %s162
      %p169 = scmp.eq.s32.totalorder %s21, 1
      %p170 = por %p168, %p169
      %p171 = scmp.ne.s32.totalorder %s162, %s163
      %p172 = scmp.eq.s32.totalorder %s21, 0
      %p173 = por %p171, %p172
      %p174 = scmp.ne.s32.totalorder %s162, %s163
      %p175 = scmp.eq.s32.totalorder %s22, 1
      %p176 = por %p174, %p175
      %p178 = scmp.ne.s32.totalorder %s163, %s177
      %p179 = scmp.eq.s32.totalorder %s22, 0
      %p180 = por %p178, %p179
      %s181 = ssub.s32 %s16, %s23
      %p182 = scmp.eq.s32.totalorder %s181, 0
      %s184 = sadd.s32 %s183, 1
      %s185 = scalar_select %p182, %s183, %s184
      %p188 = pneg %p182
      %p189 = scmp.eq.s32.totalorder %s16, 1
      %p190 = por %p188, %p189
      %p191 = scmp.ne.s32.totalorder %s183, %s186
      %p192 = scmp.eq.s32.totalorder %s16, 0
      %p193 = por %p191, %p192
      %p194 = scmp.ne.s32.totalorder %s183, %s186
      %p195 = scmp.eq.s32.totalorder %s21, 1
      %p196 = por %p194, %p195
      %p197 = scmp.ne.s32.totalorder %s186, %s187
      %p198 = scmp.eq.s32.totalorder %s21, 0
      %p199 = por %p197, %p198
      %p200 = scmp.ne.s32.totalorder %s186, %s187
      %p201 = scmp.eq.s32.totalorder %s22, 1
      %p202 = por %p200, %p201
      %p204 = scmp.ne.s32.totalorder %s187, %s203
      %p205 = scmp.eq.s32.totalorder %s22, 0
      %p206 = por %p204, %p205
      %p207 = scmp.le.s32.totalorder 1, %s16
      %p208 = scmp.lt.s32.totalorder %s16, 3
      %p209 = pnand %p207, %p208
      %p210 = pneg %p209
      // Predicated region
      $region9: #{tpu_custom_call.1} parent=5 // pred_check
        _
      $region10: #{tpu_custom_call.1} parent=5 // pred_check_branch
        %212 = sbr.rel (%p209) target = $region12
      $region11: #{tpu_custom_call.1} parent=5 // pred_region
        %s213 = ssub.s32 %s16, 1
        // Predicated region
        $region13: #{tpu_custom_call.1} parent=11 // pred_check
          %p214 = pneg %p37
        $region14: #{tpu_custom_call.1} parent=11 // pred_check_branch
          %216 = sbr.rel (%p214) target = $region16
        $region15: #{tpu_custom_call.1} parent=11 // pred_region
          _
        $region16: #{tpu_custom_call.1} parent=11 // pred_fallthru
          _
        // Predicated region
        $region17: #{tpu_custom_call.1} parent=11 // pred_check
          %p217 = pneg %p110
        $region18: #{tpu_custom_call.1} parent=11 // pred_check_branch
          %219 = sbr.rel (%p217) target = $region20
        $region19: #{tpu_custom_call.1} parent=11 // pred_region
          _
        $region20: #{tpu_custom_call.1} parent=11 // pred_fallthru
          _
        // Predicated region
        $region21: #{tpu_custom_call.1} parent=11 // pred_check
          %p220 = pneg %p131
        $region22: #{tpu_custom_call.1} parent=11 // pred_check_branch
          %222 = sbr.rel (%p220) target = $region24
        $region23: #{tpu_custom_call.1} parent=11 // pred_region
          _
        $region24: #{tpu_custom_call.1} parent=11 // pred_fallthru
          _
        // Predicated region
        $region25: #{tpu_custom_call.1} parent=11 // pred_check
          %p223 = pneg %p152
        $region26: #{tpu_custom_call.1} parent=11 // pred_check_branch
          %225 = sbr.rel (%p223) target = $region28
        $region27: #{tpu_custom_call.1} parent=11 // pred_region
          _
        $region28: #{tpu_custom_call.1} parent=11 // pred_fallthru
          _
        // Predicated region
        $region29: #{tpu_custom_call.1} parent=11 // pred_check
          %p226 = pneg %p173
        $region30: #{tpu_custom_call.1} parent=11 // pred_check_branch
          %228 = sbr.rel (%p226) target = $region32
        $region31: #{tpu_custom_call.1} parent=11 // pred_region
          _
        $region32: #{tpu_custom_call.1} parent=11 // pred_fallthru
          _
      $region12: #{tpu_custom_call.1} parent=5 // pred_fallthru
        _
      %p229 = scmp.lt.s32.totalorder %s16, 2
      // Predicated region
      $region33: #{tpu_custom_call.1} parent=5 // pred_check
        %p230 = pneg %p229
      $region34: #{tpu_custom_call.1} parent=5 // pred_check_branch
        %232 = sbr.rel (%p230) target = $region36
      $region35: #{tpu_custom_call.1} parent=5 // pred_region
        // Predicated region
        $region37: #{tpu_custom_call.1} parent=35 // pred_check
          %p233 = pneg %p57
        $region38: #{tpu_custom_call.1} parent=35 // pred_check_branch
          %235 = sbr.rel (%p233) target = $region40
        $region39: #{tpu_custom_call.1} parent=35 // pred_region
          %s236 = smul.u32 8, %s16
          %p237 = scmp.lt.s32.totalorder %s236, 15
          %s238 = scalar_select %p237, %s236, 15
          %s239 = smul.addr %s238, 8
          %s240 = scalar_lea.vmem %s1, %s239
          %s241 = smul.u32 8, %s16
        $region40: #{tpu_custom_call.1} parent=35 // pred_fallthru
          _
        // Predicated region
        $region41: #{tpu_custom_call.1} parent=35 // pred_check
          %p242 = pneg %p83
        $region42: #{tpu_custom_call.1} parent=35 // pred_check_branch
          %244 = sbr.rel (%p242) target = $region44
        $region43: #{tpu_custom_call.1} parent=35 // pred_region
          %s245 = sand.u32 %s73, 1
          %s246 = sand.u32 %s73, 1
          %s247 = smul.addr %s246, 64
          %s248 = scalar_lea.vmem [#allocation2], %s247
          %s249 = smul.u32 8, %s16
          %s250 = smul.addr %s249, 4
          %s251 = scalar_lea.vmem %s2, %s250
          // Predicated region
          $region45: #{tpu_custom_call.1} parent=43 // pred_check
            _
          $region46: #{tpu_custom_call.1} parent=43 // pred_check_branch
            %253 = sbr.rel (0) target = $region48
          $region47: #{tpu_custom_call.1} parent=43 // pred_region
            // Predicated region
            $region49: #{tpu_custom_call.1} parent=47 // pred_check
              _
            $region50: #{tpu_custom_call.1} parent=47 // pred_check_branch
              %255 = sbr.rel target = $region52
            $region51: #{tpu_custom_call.1} parent=47 // pred_region
              // Predicated region
              $region64: #{tpu_custom_call.1} parent=51 // pred_check
                _
              $region65: #{tpu_custom_call.1} parent=51 // pred_check_branch
                %300 = sbr.rel (0) target = $region67
              $region66: #{tpu_custom_call.1} parent=51 // pred_region
                loop: start=0, step=1, limit=1
                $region68: #{tpu_custom_call.1} parent=66 // loop_pre_header
                  _
                $region69: #{tpu_custom_call.1} parent=66 // loop_header
                  %s302 = sphi 0, %s306
                  %p303 = scmp.ge.s32.totalorder %s302, 1
                  %s307 = sphi %s251, %s251
                  %s308 = sphi %s248, %s248
                $region70: #{tpu_custom_call.1} parent=66 // loop_header_branch
                  %305 = sbr.rel (%p303) target = $region74
                $region71: #{tpu_custom_call.1} parent=66 // loop_body
                  _
                $region72: #{tpu_custom_call.1} parent=66 // loop_footer
                  %s306 = sadd.s32 1, %s302
                $region73: #{tpu_custom_call.1} parent=66 // loop_footer_branch
                  %301 = sbr.rel target = $region69
                $region74: #{tpu_custom_call.1} parent=66 // loop_exit
                  _
                loop: start=0, step=1, limit=1
                $region75: #{tpu_custom_call.1} parent=66 // loop_pre_header
                  _
                $region76: #{tpu_custom_call.1} parent=66 // loop_header
                  %s311 = sphi 0, %s315
                  %p312 = scmp.ge.s32.totalorder %s311, 1
                  %s316 = sphi %s251, %s251
                  %s317 = sphi %s248, %s248
                $region77: #{tpu_custom_call.1} parent=66 // loop_header_branch
                  %314 = sbr.rel (%p312) target = $region81
                $region78: #{tpu_custom_call.1} parent=66 // loop_body
                  %v318 = vld [vmem:[%s316] sm:$0xf]
                  %319 = vst [vmem:[%s317] sm:$0xf] %v318
                  %v320 = vld [vmem:[%s316 + $0x4] sm:$0xf]
                  %321 = vst [vmem:[%s317 + $0x4] sm:$0xf] %v320
                  %v322 = vld [vmem:[%s316 + $0x8] sm:$0xf]
                  %323 = vst [vmem:[%s317 + $0x8] sm:$0xf] %v322
                  %v324 = vld [vmem:[%s316 + $0xc] sm:$0xf]
                  %325 = vst [vmem:[%s317 + $0xc] sm:$0xf] %v324
                  %v326 = vld [vmem:[%s316 + $0x10] sm:$0xf]
                  %327 = vst [vmem:[%s317 + $0x10] sm:$0xf] %v326
                  %v328 = vld [vmem:[%s316 + $0x14] sm:$0xf]
                  %329 = vst [vmem:[%s317 + $0x14] sm:$0xf] %v328
                  %v330 = vld [vmem:[%s316 + $0x18] sm:$0xf]
                  %331 = vst [vmem:[%s317 + $0x18] sm:$0xf] %v330
                  %v332 = vld [vmem:[%s316 + $0x1c] sm:$0xf]
                  %333 = vst [vmem:[%s317 + $0x1c] sm:$0xf] %v332
                  %v334 = vld [vmem:[%s316 + $0x40] sm:$0xf]
                  %335 = vst [vmem:[%s317 + $0x20] sm:$0xf] %v334
                  %v336 = vld [vmem:[%s316 + $0x44] sm:$0xf]
                  %337 = vst [vmem:[%s317 + $0x24] sm:$0xf] %v336
                  %v338 = vld [vmem:[%s316 + $0x48] sm:$0xf]
                  %339 = vst [vmem:[%s317 + $0x28] sm:$0xf] %v338
                  %v340 = vld [vmem:[%s316 + $0x4c] sm:$0xf]
                  %341 = vst [vmem:[%s317 + $0x2c] sm:$0xf] %v340
                  %v342 = vld [vmem:[%s316 + $0x50] sm:$0xf]
                  %343 = vst [vmem:[%s317 + $0x30] sm:$0xf] %v342
                  %v344 = vld [vmem:[%s316 + $0x54] sm:$0xf]
                  %345 = vst [vmem:[%s317 + $0x34] sm:$0xf] %v344
                  %v346 = vld [vmem:[%s316 + $0x58] sm:$0xf]
                  %347 = vst [vmem:[%s317 + $0x38] sm:$0xf] %v346
                  %v348 = vld [vmem:[%s316 + $0x5c] sm:$0xf]
                  %349 = vst [vmem:[%s317 + $0x3c] sm:$0xf] %v348
                $region79: #{tpu_custom_call.1} parent=66 // loop_footer
                  %s315 = sadd.s32 1, %s311
                $region80: #{tpu_custom_call.1} parent=66 // loop_footer_branch
                  %310 = sbr.rel target = $region76
                $region81: #{tpu_custom_call.1} parent=66 // loop_exit
                  _
              $region67: #{tpu_custom_call.1} parent=51 // pred_fallthru
                _
            $region52: #{tpu_custom_call.1} parent=47 // pred_fallthru
              _
            // Predicated region
            $region53: #{tpu_custom_call.1} parent=47 // pred_check
              _
            $region54: #{tpu_custom_call.1} parent=47 // pred_check_branch
              %257 = sbr.rel (0) target = $region56
            $region55: #{tpu_custom_call.1} parent=47 // pred_region
              loop: start=0, step=1, limit=1
              $region57: #{tpu_custom_call.1} parent=55 // loop_pre_header
                _
              $region58: #{tpu_custom_call.1} parent=55 // loop_header
                %s260 = sphi 0, %s264
                %p261 = scmp.ge.s32.totalorder %s260, 1
                %s265 = sphi %s251, %s251
                %s266 = sphi %s248, %s248
              $region59: #{tpu_custom_call.1} parent=55 // loop_header_branch
                %263 = sbr.rel (%p261) target = $region63
              $region60: #{tpu_custom_call.1} parent=55 // loop_body
                %v267 = vld [vmem:[%s265] sm:$0xf]
                %268 = vst [vmem:[%s266] sm:$0xf] %v267
                %v269 = vld [vmem:[%s265 + $0x4] sm:$0xf]
                %270 = vst [vmem:[%s266 + $0x4] sm:$0xf] %v269
                %v271 = vld [vmem:[%s265 + $0x8] sm:$0xf]
                %272 = vst [vmem:[%s266 + $0x8] sm:$0xf] %v271
                %v273 = vld [vmem:[%s265 + $0xc] sm:$0xf]
                %274 = vst [vmem:[%s266 + $0xc] sm:$0xf] %v273
                %v275 = vld [vmem:[%s265 + $0x10] sm:$0xf]
                %276 = vst [vmem:[%s266 + $0x10] sm:$0xf] %v275
                %v277 = vld [vmem:[%s265 + $0x14] sm:$0xf]
                %278 = vst [vmem:[%s266 + $0x14] sm:$0xf] %v277
                %v279 = vld [vmem:[%s265 + $0x18] sm:$0xf]
                %280 = vst [vmem:[%s266 + $0x18] sm:$0xf] %v279
                %v281 = vld [vmem:[%s265 + $0x1c] sm:$0xf]
                %282 = vst [vmem:[%s266 + $0x1c] sm:$0xf] %v281
                %v283 = vld [vmem:[%s265 + $0x40] sm:$0xf]
                %284 = vst [vmem:[%s266 + $0x20] sm:$0xf] %v283
                %v285 = vld [vmem:[%s265 + $0x44] sm:$0xf]
                %286 = vst [vmem:[%s266 + $0x24] sm:$0xf] %v285
                %v287 = vld [vmem:[%s265 + $0x48] sm:$0xf]
                %288 = vst [vmem:[%s266 + $0x28] sm:$0xf] %v287
                %v289 = vld [vmem:[%s265 + $0x4c] sm:$0xf]
                %290 = vst [vmem:[%s266 + $0x2c] sm:$0xf] %v289
                %v291 = vld [vmem:[%s265 + $0x50] sm:$0xf]
                %292 = vst [vmem:[%s266 + $0x30] sm:$0xf] %v291
                %v293 = vld [vmem:[%s265 + $0x54] sm:$0xf]
                %294 = vst [vmem:[%s266 + $0x34] sm:$0xf] %v293
                %v295 = vld [vmem:[%s265 + $0x58] sm:$0xf]
                %296 = vst [vmem:[%s266 + $0x38] sm:$0xf] %v295
                %v297 = vld [vmem:[%s265 + $0x5c] sm:$0xf]
                %298 = vst [vmem:[%s266 + $0x3c] sm:$0xf] %v297
              $region61: #{tpu_custom_call.1} parent=55 // loop_footer
                %s264 = sadd.s32 1, %s260
              $region62: #{tpu_custom_call.1} parent=55 // loop_footer_branch
                %259 = sbr.rel target = $region58
              $region63: #{tpu_custom_call.1} parent=55 // loop_exit
                _
            $region56: #{tpu_custom_call.1} parent=47 // pred_fallthru
              _
          $region48: #{tpu_custom_call.1} parent=43 // pred_fallthru
            _
          %350 = vnop
        $region44: #{tpu_custom_call.1} parent=35 // pred_fallthru
          _
      $region36: #{tpu_custom_call.1} parent=5 // pred_fallthru
        _
      %p351 = scmp.le.s32.totalorder 1, %s16
      %p352 = scmp.lt.s32.totalorder %s16, 3
      %p353 = pnand %p351, %p352
      %p354 = pneg %p353
      // Predicated region
      $region82: #{tpu_custom_call.1} parent=5 // pred_check
        _
      $region83: #{tpu_custom_call.1} parent=5 // pred_check_branch
        %356 = sbr.rel (%p353) target = $region85
      $region84: #{tpu_custom_call.1} parent=5 // pred_region
        %s357 = ssub.s32 %s16, 1
        %s358 = sand.u32 %s76, 1
        %s359 = sand.u32 %s76, 1
        %s360 = smul.addr %s359, 64
        %s361 = scalar_lea.vmem [#allocation2], %s360
        // Predicated region
        $region86: #{tpu_custom_call.1} parent=84 // pred_check
          %p362 = pneg %p89
        $region87: #{tpu_custom_call.1} parent=84 // pred_check_branch
          %364 = sbr.rel (%p362) target = $region89
        $region88: #{tpu_custom_call.1} parent=84 // pred_region
          _
        $region89: #{tpu_custom_call.1} parent=84 // pred_fallthru
          _
        %p365 = pneg %p37
        %p366 = pneg %p34
        %s367 = smul.u32 8, %s21
        %p368 = scmp.lt.s32.totalorder %s367, 15
        %s369 = scalar_select %p368, %s367, 15
        %s370 = smul.addr %s369, 8
        %s371 = scalar_lea.vmem %s1, %s370
        %p372 = pneg %p63
        %p373 = pneg %p60
        %s374 = sand.u32 %s76, 1
        %s375 = sand.u32 %s76, 1
        %s376 = smul.addr %s375, 64
        %s377 = scalar_lea.vmem [#allocation2], %s376
        %p378 = pneg %p89
        %p379 = pneg %p86
        %p380 = pneg %p110
        %p381 = pneg %p107
        %p382 = pneg %p131
        %p383 = pneg %p128
        %p384 = pneg %p152
        %p385 = pneg %p149
        %p386 = pneg %p173
        %p387 = pneg %p170
        %p388 = pneg %p199
        %p389 = pneg %p196
        %s390 = sand.u32 %s186, 1
        %s391 = scalar_lea.sflag [#allocation4], %s390
        %s392 = sand.u32 %s186, 1
        %s393 = smul.addr %s392, 64
        %s394 = scalar_lea.vmem [#allocation3], %s393
        %s395 = smul.u32 8, %s21
        %p396 = scmp.lt.s32.totalorder %s395, 15
        %s397 = scalar_select %p396, %s395, 15
        %s398 = smul.addr %s397, 8
        %s399 = scalar_lea.vmem %s1, %s398
        %s400 = smul.u32 8, %s21
        %s401 = smul.u32 8, %s21
        %s402 = smul.u32 8, %s21
        %v404 = vld [vmem:[%s399] sm:$0xff]
        %v405 = vld [vmem:[%s399 + $0x8] sm:$0xff]
        %v406 = vld [vmem:[%s399 + $0x10] sm:$0xff]
        %v407 = vld [vmem:[%s399 + $0x18] sm:$0xff]
        %v408 = vld [vmem:[%s399 + $0x20] sm:$0xff]
        %v409 = vld [vmem:[%s399 + $0x28] sm:$0xff]
        %v410 = vld [vmem:[%s399 + $0x30] sm:$0xff]
        %v411 = vld [vmem:[%s399 + $0x38] sm:$0xff]
        %v412 = vld [vmem:[%s0] sm:$0x1]
        %414 = vset.pattern.permute.xlu0 0
        %415 = vperm.xlu0 %414, %v404
        %v416 = vpop.permute.xlu0 %415
        %419 = vset.pattern.permute.xlu0 0
        %420 = vperm.xlu0 %419, %v405
        %v421 = vpop.permute.xlu0 %420
        %424 = vset.pattern.permute.xlu0 0
        %425 = vperm.xlu0 %424, %v406
        %v426 = vpop.permute.xlu0 %425
        %429 = vset.pattern.permute.xlu0 0
        %430 = vperm.xlu0 %429, %v407
        %v431 = vpop.permute.xlu0 %430
        %434 = vset.pattern.permute.xlu0 0
        %435 = vperm.xlu0 %434, %v408
        %v436 = vpop.permute.xlu0 %435
        %439 = vset.pattern.permute.xlu0 0
        %440 = vperm.xlu0 %439, %v409
        %v441 = vpop.permute.xlu0 %440
        %444 = vset.pattern.permute.xlu0 0
        %445 = vperm.xlu0 %444, %v410
        %v446 = vpop.permute.xlu0 %445
        %449 = vset.pattern.permute.xlu0 0
        %450 = vperm.xlu0 %449, %v411
        %v451 = vpop.permute.xlu0 %450
        %v453 = vlaneseq
        %v454 = vshrl.u32 %v453, 7
        %v455 = vsub.s32 0, %v454
        %v456 = vrot.slane %v412, %v455
        %v457 = vadd.f32 %v416, %v456
        %v458 = vadd.f32 %v421, %v456
        %v459 = vadd.f32 %v426, %v456
        %v460 = vadd.f32 %v431, %v456
        %v461 = vadd.f32 %v436, %v456
        %v462 = vadd.f32 %v441, %v456
        %v463 = vadd.f32 %v446, %v456
        %v464 = vadd.f32 %v451, %v456
        %v465 = vld [vmem:[%s361] sm:$0xf]
        %v466 = vld [vmem:[%s361 + $0x4] sm:$0xf]
        %v467 = vld [vmem:[%s361 + $0x8] sm:$0xf]
        %v468 = vld [vmem:[%s361 + $0xc] sm:$0xf]
        %v469 = vld [vmem:[%s361 + $0x10] sm:$0xf]
        %v470 = vld [vmem:[%s361 + $0x14] sm:$0xf]
        %v471 = vld [vmem:[%s361 + $0x18] sm:$0xf]
        %v472 = vld [vmem:[%s361 + $0x1c] sm:$0xf]
        %v473 = vunpack.c.l.bf16 %v465
        %v474 = vunpack.c.l.bf16 %v466
        %v475 = vunpack.c.l.bf16 %v467
        %v476 = vunpack.c.l.bf16 %v468
        %v477 = vunpack.c.l.bf16 %v469
        %v478 = vunpack.c.l.bf16 %v470
        %v479 = vunpack.c.l.bf16 %v471
        %v480 = vunpack.c.l.bf16 %v472
        %v481 = vadd.f32 %v457, %v473
        %v482 = vadd.f32 %v458, %v474
        %v483 = vadd.f32 %v459, %v475
        %v484 = vadd.f32 %v460, %v476
        %v485 = vadd.f32 %v461, %v477
        %v486 = vadd.f32 %v462, %v478
        %v487 = vadd.f32 %v463, %v479
        %v488 = vadd.f32 %v464, %v480
        %vm489 = vcmp.ge.f32.partialorder %v481, 0.0
        %vm490 = vcmp.ge.f32.partialorder %v482, 0.0
        %vm491 = vcmp.ge.f32.partialorder %v483, 0.0
        %vm492 = vcmp.ge.f32.partialorder %v484, 0.0
        %vm493 = vcmp.ge.f32.partialorder %v485, 0.0
        %vm494 = vcmp.ge.f32.partialorder %v486, 0.0
        %vm495 = vcmp.ge.f32.partialorder %v487, 0.0
        %vm496 = vcmp.ge.f32.partialorder %v488, 0.0
        %v497 = vmul.f32 %v481, 0.2
        %v498 = vmul.f32 %v482, 0.2
        %v499 = vmul.f32 %v483, 0.2
        %v500 = vmul.f32 %v484, 0.2
        %v501 = vmul.f32 %v485, 0.2
        %v502 = vmul.f32 %v486, 0.2
        %v503 = vmul.f32 %v487, 0.2
        %v504 = vmul.f32 %v488, 0.2
        %v505 = vsel %vm489, %v481, %v497
        %v506 = vsel %vm490, %v482, %v498
        %v507 = vsel %vm491, %v483, %v499
        %v508 = vsel %vm492, %v484, %v500
        %v509 = vsel %vm493, %v485, %v501
        %v510 = vsel %vm494, %v486, %v502
        %v511 = vsel %vm495, %v487, %v503
        %v512 = vsel %vm496, %v488, %v504
        %513 = vmax.xlane.f32.xlu0 %v505
        %v514 = vpop.xlane.xlu0 %513
        %515 = vmax.xlane.f32.xlu0 %v506
        %v516 = vpop.xlane.xlu0 %515
        %517 = vmax.xlane.f32.xlu0 %v507
        %v518 = vpop.xlane.xlu0 %517
        %519 = vmax.xlane.f32.xlu0 %v508
        %v520 = vpop.xlane.xlu0 %519
        %521 = vmax.xlane.f32.xlu0 %v509
        %v522 = vpop.xlane.xlu0 %521
        %523 = vmax.xlane.f32.xlu0 %v510
        %v524 = vpop.xlane.xlu0 %523
        %525 = vmax.xlane.f32.xlu0 %v511
        %v526 = vpop.xlane.xlu0 %525
        %527 = vmax.xlane.f32.xlu0 %v512
        %v528 = vpop.xlane.xlu0 %527
        %vm529 = vcmp.lt.f32.partialorder %v514, -1e+20
        %vm530 = vcmp.lt.f32.partialorder %v516, -1e+20
        %vm531 = vcmp.lt.f32.partialorder %v518, -1e+20
        %vm532 = vcmp.lt.f32.partialorder %v520, -1e+20
        %vm533 = vcmp.lt.f32.partialorder %v522, -1e+20
        %vm534 = vcmp.lt.f32.partialorder %v524, -1e+20
        %vm535 = vcmp.lt.f32.partialorder %v526, -1e+20
        %vm536 = vcmp.lt.f32.partialorder %v528, -1e+20
        %v537 = vsel %vm529, 0.0, %v514
        %v538 = vsel %vm530, 0.0, %v516
        %v539 = vsel %vm531, 0.0, %v518
        %v540 = vsel %vm532, 0.0, %v520
        %v541 = vsel %vm533, 0.0, %v522
        %v542 = vsel %vm534, 0.0, %v524
        %v543 = vsel %vm535, 0.0, %v526
        %v544 = vsel %vm536, 0.0, %v528
        %v545 = vsub.f32 %v505, %v537
        %v546 = vsub.f32 %v506, %v538
        %v547 = vsub.f32 %v507, %v539
        %v548 = vsub.f32 %v508, %v540
        %v549 = vsub.f32 %v509, %v541
        %v550 = vsub.f32 %v510, %v542
        %v551 = vsub.f32 %v511, %v543
        %v552 = vsub.f32 %v512, %v544
        %v553 = vmul.f32 %v545, 1.442695
        %v554 = vpow.pop %v553
        %v555 = vmul.f32 %v546, 1.442695
        %v556 = vpow.pop %v555
        %v557 = vmul.f32 %v547, 1.442695
        %v558 = vpow.pop %v557
        %v559 = vmul.f32 %v548, 1.442695
        %v560 = vpow.pop %v559
        %v561 = vmul.f32 %v549, 1.442695
        %v562 = vpow.pop %v561
        %v563 = vmul.f32 %v550, 1.442695
        %v564 = vpow.pop %v563
        %v565 = vmul.f32 %v551, 1.442695
        %v566 = vpow.pop %v565
        %v567 = vmul.f32 %v552, 1.442695
        %v568 = vpow.pop %v567
        %569 = vadd.xlane.f32.xlu0 %v554
        %v570 = vpop.xlane.xlu0 %569
        %571 = vadd.xlane.f32.xlu0 %v556
        %v572 = vpop.xlane.xlu0 %571
        %573 = vadd.xlane.f32.xlu0 %v558
        %v574 = vpop.xlane.xlu0 %573
        %575 = vadd.xlane.f32.xlu0 %v560
        %v576 = vpop.xlane.xlu0 %575
        %577 = vadd.xlane.f32.xlu0 %v562
        %v578 = vpop.xlane.xlu0 %577
        %579 = vadd.xlane.f32.xlu0 %v564
        %v580 = vpop.xlane.xlu0 %579
        %581 = vadd.xlane.f32.xlu0 %v566
        %v582 = vpop.xlane.xlu0 %581
        %583 = vadd.xlane.f32.xlu0 %v568
        %v584 = vpop.xlane.xlu0 %583
        %vm585 = vcmp.eq.f32.partialorder %v570, 0.0
        %vm586 = vcmp.eq.f32.partialorder %v572, 0.0
        %vm587 = vcmp.eq.f32.partialorder %v574, 0.0
        %vm588 = vcmp.eq.f32.partialorder %v576, 0.0
        %vm589 = vcmp.eq.f32.partialorder %v578, 0.0
        %vm590 = vcmp.eq.f32.partialorder %v580, 0.0
        %vm591 = vcmp.eq.f32.partialorder %v582, 0.0
        %vm592 = vcmp.eq.f32.partialorder %v584, 0.0
        %v593 = vsel %vm585, 1.0, %v570
        %v594 = vsel %vm586, 1.0, %v572
        %v595 = vsel %vm587, 1.0, %v574
        %v596 = vsel %vm588, 1.0, %v576
        %v597 = vsel %vm589, 1.0, %v578
        %v598 = vsel %vm590, 1.0, %v580
        %v599 = vsel %vm591, 1.0, %v582
        %v600 = vsel %vm592, 1.0, %v584
        %v601 = vrcp.pop %v593
        %v602 = vmul.f32 1.0, %v601
        %v603 = vrcp.pop %v594
        %v604 = vmul.f32 1.0, %v603
        %v605 = vrcp.pop %v595
        %v606 = vmul.f32 1.0, %v605
        %v607 = vrcp.pop %v596
        %v608 = vmul.f32 1.0, %v607
        %v609 = vrcp.pop %v597
        %v610 = vmul.f32 1.0, %v609
        %v611 = vrcp.pop %v598
        %v612 = vmul.f32 1.0, %v611
        %v613 = vrcp.pop %v599
        %v614 = vmul.f32 1.0, %v613
        %v615 = vrcp.pop %v600
        %v616 = vmul.f32 1.0, %v615
        %v617 = vmul.f32 %v554, %v602
        %v618 = vmul.f32 %v556, %v604
        %v619 = vmul.f32 %v558, %v606
        %v620 = vmul.f32 %v560, %v608
        %v621 = vmul.f32 %v562, %v610
        %v622 = vmul.f32 %v564, %v612
        %v623 = vmul.f32 %v566, %v614
        %v624 = vmul.f32 %v568, %v616
        %v625 = vpack.c.bf16 %v618, %v617
        %v626 = vpack.c.bf16 %v620, %v619
        %v627 = vpack.c.bf16 %v622, %v621
        %v628 = vpack.c.bf16 %v624, %v623
        %v629 = vld [vmem:[%s3] sm:$0xf]
        %v630 = vld [vmem:[%s3 + $0x4] sm:$0xf]
        %v631 = vld [vmem:[%s3 + $0x8] sm:$0xf]
        %v632 = vld [vmem:[%s3 + $0xc] sm:$0xf]
        %v633 = vld [vmem:[%s3 + $0x10] sm:$0xf]
        %v634 = vld [vmem:[%s3 + $0x14] sm:$0xf]
        %v635 = vld [vmem:[%s3 + $0x18] sm:$0xf]
        %v636 = vld [vmem:[%s3 + $0x1c] sm:$0xf]
        %v637 = vld [vmem:[%s3 + $0x20] sm:$0xf]
        %v638 = vld [vmem:[%s3 + $0x24] sm:$0xf]
        %v639 = vld [vmem:[%s3 + $0x28] sm:$0xf]
        %v640 = vld [vmem:[%s3 + $0x2c] sm:$0xf]
        %v641 = vld [vmem:[%s3 + $0x30] sm:$0xf]
        %v642 = vld [vmem:[%s3 + $0x34] sm:$0xf]
        %v643 = vld [vmem:[%s3 + $0x38] sm:$0xf]
        %v644 = vld [vmem:[%s3 + $0x3c] sm:$0xf]
        %v645 = vld [vmem:[%s0 + $0x1] sm:$0x1]
        %646 = vset.pattern.permute.xlu0 1
        %647 = vperm.xlu0 %646, %v404
        %v648 = vpop.permute.xlu0 %647
        %650 = vset.pattern.permute.xlu0 1
        %651 = vperm.xlu0 %650, %v405
        %v652 = vpop.permute.xlu0 %651
        %654 = vset.pattern.permute.xlu0 1
        %655 = vperm.xlu0 %654, %v406
        %v656 = vpop.permute.xlu0 %655
        %658 = vset.pattern.permute.xlu0 1
        %659 = vperm.xlu0 %658, %v407
        %v660 = vpop.permute.xlu0 %659
        %662 = vset.pattern.permute.xlu0 1
        %663 = vperm.xlu0 %662, %v408
        %v664 = vpop.permute.xlu0 %663
        %666 = vset.pattern.permute.xlu0 1
        %667 = vperm.xlu0 %666, %v409
        %v668 = vpop.permute.xlu0 %667
        %670 = vset.pattern.permute.xlu0 1
        %671 = vperm.xlu0 %670, %v410
        %v672 = vpop.permute.xlu0 %671
        %674 = vset.pattern.permute.xlu0 1
        %675 = vperm.xlu0 %674, %v411
        %v676 = vpop.permute.xlu0 %675
        %v678 = vlaneseq
        %v679 = vshrl.u32 %v678, 7
        %v680 = vsub.s32 0, %v679
        %v681 = vrot.slane %v645, %v680
        %v682 = vadd.f32 %v648, %v681
        %v683 = vadd.f32 %v652, %v681
        %v684 = vadd.f32 %v656, %v681
        %v685 = vadd.f32 %v660, %v681
        %v686 = vadd.f32 %v664, %v681
        %v687 = vadd.f32 %v668, %v681
        %v688 = vadd.f32 %v672, %v681
        %v689 = vadd.f32 %v676, %v681
        %s690 = scalar_lea.vmem %s361, 32 [#allocation2]
        %v691 = vld [vmem:[%s690] sm:$0xf]
        %v692 = vld [vmem:[%s690 + $0x4] sm:$0xf]
        %v693 = vld [vmem:[%s690 + $0x8] sm:$0xf]
        %v694 = vld [vmem:[%s690 + $0xc] sm:$0xf]
        %v695 = vld [vmem:[%s690 + $0x10] sm:$0xf]
        %v696 = vld [vmem:[%s690 + $0x14] sm:$0xf]
        %v697 = vld [vmem:[%s690 + $0x18] sm:$0xf]
        %v698 = vld [vmem:[%s690 + $0x1c] sm:$0xf]
        %v699 = vunpack.c.l.bf16 %v691
        %v700 = vunpack.c.l.bf16 %v692
        %v701 = vunpack.c.l.bf16 %v693
        %v702 = vunpack.c.l.bf16 %v694
        %v703 = vunpack.c.l.bf16 %v695
        %v704 = vunpack.c.l.bf16 %v696
        %v705 = vunpack.c.l.bf16 %v697
        %v706 = vunpack.c.l.bf16 %v698
        %v707 = vadd.f32 %v682, %v699
        %v708 = vadd.f32 %v683, %v700
        %v709 = vadd.f32 %v684, %v701
        %v710 = vadd.f32 %v685, %v702
        %v711 = vadd.f32 %v686, %v703
        %v712 = vadd.f32 %v687, %v704
        %v713 = vadd.f32 %v688, %v705
        %v714 = vadd.f32 %v689, %v706
        %vm715 = vcmp.ge.f32.partialorder %v707, 0.0
        %vm716 = vcmp.ge.f32.partialorder %v708, 0.0
        %vm717 = vcmp.ge.f32.partialorder %v709, 0.0
        %vm718 = vcmp.ge.f32.partialorder %v710, 0.0
        %vm719 = vcmp.ge.f32.partialorder %v711, 0.0
        %vm720 = vcmp.ge.f32.partialorder %v712, 0.0
        %vm721 = vcmp.ge.f32.partialorder %v713, 0.0
        %vm722 = vcmp.ge.f32.partialorder %v714, 0.0
        %v723 = vmul.f32 %v707, 0.2
        %v724 = vmul.f32 %v708, 0.2
        %v725 = vmul.f32 %v709, 0.2
        %v726 = vmul.f32 %v710, 0.2
        %v727 = vmul.f32 %v711, 0.2
        %v728 = vmul.f32 %v712, 0.2
        %v729 = vmul.f32 %v713, 0.2
        %v730 = vmul.f32 %v714, 0.2
        %v731 = vsel %vm715, %v707, %v723
        %v732 = vsel %vm716, %v708, %v724
        %v733 = vsel %vm717, %v709, %v725
        %v734 = vsel %vm718, %v710, %v726
        %v735 = vsel %vm719, %v711, %v727
        %v736 = vsel %vm720, %v712, %v728
        %v737 = vsel %vm721, %v713, %v729
        %v738 = vsel %vm722, %v714, %v730
        %739 = vmax.xlane.f32.xlu0 %v731
        %v740 = vpop.xlane.xlu0 %739
        %741 = vmax.xlane.f32.xlu0 %v732
        %v742 = vpop.xlane.xlu0 %741
        %743 = vmax.xlane.f32.xlu0 %v733
        %v744 = vpop.xlane.xlu0 %743
        %745 = vmax.xlane.f32.xlu0 %v734
        %v746 = vpop.xlane.xlu0 %745
        %747 = vmax.xlane.f32.xlu0 %v735
        %v748 = vpop.xlane.xlu0 %747
        %749 = vmax.xlane.f32.xlu0 %v736
        %v750 = vpop.xlane.xlu0 %749
        %751 = vmax.xlane.f32.xlu0 %v737
        %v752 = vpop.xlane.xlu0 %751
        %753 = vmax.xlane.f32.xlu0 %v738
        %v754 = vpop.xlane.xlu0 %753
        %vm755 = vcmp.lt.f32.partialorder %v740, -1e+20
        %vm756 = vcmp.lt.f32.partialorder %v742, -1e+20
        %vm757 = vcmp.lt.f32.partialorder %v744, -1e+20
        %vm758 = vcmp.lt.f32.partialorder %v746, -1e+20
        %vm759 = vcmp.lt.f32.partialorder %v748, -1e+20
        %vm760 = vcmp.lt.f32.partialorder %v750, -1e+20
        %vm761 = vcmp.lt.f32.partialorder %v752, -1e+20
        %vm762 = vcmp.lt.f32.partialorder %v754, -1e+20
        %v763 = vsel %vm755, 0.0, %v740
        %v764 = vsel %vm756, 0.0, %v742
        %v765 = vsel %vm757, 0.0, %v744
        %v766 = vsel %vm758, 0.0, %v746
        %v767 = vsel %vm759, 0.0, %v748
        %v768 = vsel %vm760, 0.0, %v750
        %v769 = vsel %vm761, 0.0, %v752
        %v770 = vsel %vm762, 0.0, %v754
        %v771 = vsub.f32 %v731, %v763
        %v772 = vsub.f32 %v732, %v764
        %v773 = vsub.f32 %v733, %v765
        %v774 = vsub.f32 %v734, %v766
        %v775 = vsub.f32 %v735, %v767
        %v776 = vsub.f32 %v736, %v768
        %v777 = vsub.f32 %v737, %v769
        %v778 = vsub.f32 %v738, %v770
        %v779 = vmul.f32 %v771, 1.442695
        %v780 = vpow.pop %v779
        %v781 = vmul.f32 %v772, 1.442695
        %v782 = vpow.pop %v781
        %v783 = vmul.f32 %v773, 1.442695
        %v784 = vpow.pop %v783
        %v785 = vmul.f32 %v774, 1.442695
        %v786 = vpow.pop %v785
        %v787 = vmul.f32 %v775, 1.442695
        %v788 = vpow.pop %v787
        %v789 = vmul.f32 %v776, 1.442695
        %v790 = vpow.pop %v789
        %v791 = vmul.f32 %v777, 1.442695
        %v792 = vpow.pop %v791
        %v793 = vmul.f32 %v778, 1.442695
        %v794 = vpow.pop %v793
        %795 = vadd.xlane.f32.xlu0 %v780
        %v796 = vpop.xlane.xlu0 %795
        %797 = vadd.xlane.f32.xlu0 %v782
        %v798 = vpop.xlane.xlu0 %797
        %799 = vadd.xlane.f32.xlu0 %v784
        %v800 = vpop.xlane.xlu0 %799
        %801 = vadd.xlane.f32.xlu0 %v786
        %v802 = vpop.xlane.xlu0 %801
        %803 = vadd.xlane.f32.xlu0 %v788
        %v804 = vpop.xlane.xlu0 %803
        %805 = vadd.xlane.f32.xlu0 %v790
        %v806 = vpop.xlane.xlu0 %805
        %807 = vadd.xlane.f32.xlu0 %v792
        %v808 = vpop.xlane.xlu0 %807
        %809 = vadd.xlane.f32.xlu0 %v794
        %v810 = vpop.xlane.xlu0 %809
        %vm811 = vcmp.eq.f32.partialorder %v796, 0.0
        %vm812 = vcmp.eq.f32.partialorder %v798, 0.0
        %vm813 = vcmp.eq.f32.partialorder %v800, 0.0
        %vm814 = vcmp.eq.f32.partialorder %v802, 0.0
        %vm815 = vcmp.eq.f32.partialorder %v804, 0.0
        %vm816 = vcmp.eq.f32.partialorder %v806, 0.0
        %vm817 = vcmp.eq.f32.partialorder %v808, 0.0
        %vm818 = vcmp.eq.f32.partialorder %v810, 0.0
        %v819 = vsel %vm811, 1.0, %v796
        %v820 = vsel %vm812, 1.0, %v798
        %v821 = vsel %vm813, 1.0, %v800
        %v822 = vsel %vm814, 1.0, %v802
        %v823 = vsel %vm815, 1.0, %v804
        %v824 = vsel %vm816, 1.0, %v806
        %v825 = vsel %vm817, 1.0, %v808
        %v826 = vsel %vm818, 1.0, %v810
        %v827 = vrcp.pop %v819
        %v828 = vmul.f32 1.0, %v827
        %v829 = vrcp.pop %v820
        %v830 = vmul.f32 1.0, %v829
        %v831 = vrcp.pop %v821
        %v832 = vmul.f32 1.0, %v831
        %v833 = vrcp.pop %v822
        %v834 = vmul.f32 1.0, %v833
        %v835 = vrcp.pop %v823
        %v836 = vmul.f32 1.0, %v835
        %v837 = vrcp.pop %v824
        %v838 = vmul.f32 1.0, %v837
        %v839 = vrcp.pop %v825
        %v840 = vmul.f32 1.0, %v839
        %v841 = vrcp.pop %v826
        %v842 = vmul.f32 1.0, %v841
        %v843 = vmul.f32 %v780, %v828
        %v844 = vmul.f32 %v782, %v830
        %v845 = vmul.f32 %v784, %v832
        %v846 = vmul.f32 %v786, %v834
        %v847 = vmul.f32 %v788, %v836
        %v848 = vmul.f32 %v790, %v838
        %v849 = vmul.f32 %v792, %v840
        %v850 = vmul.f32 %v794, %v842
        %v851 = vpack.c.bf16 %v844, %v843
        %v852 = vpack.c.bf16 %v846, %v845
        %v853 = vpack.c.bf16 %v848, %v847
        %v854 = vpack.c.bf16 %v850, %v849
        %s855 = scalar_lea.vmem %s3, 64
        %v856 = vld [vmem:[%s855] sm:$0xf]
        %v857 = vld [vmem:[%s855 + $0x4] sm:$0xf]
        %v858 = vld [vmem:[%s855 + $0x8] sm:$0xf]
        %v859 = vld [vmem:[%s855 + $0xc] sm:$0xf]
        %v860 = vld [vmem:[%s855 + $0x10] sm:$0xf]
        %v861 = vld [vmem:[%s855 + $0x14] sm:$0xf]
        %v862 = vld [vmem:[%s855 + $0x18] sm:$0xf]
        %v863 = vld [vmem:[%s855 + $0x1c] sm:$0xf]
        %v864 = vld [vmem:[%s855 + $0x20] sm:$0xf]
        %v865 = vld [vmem:[%s855 + $0x24] sm:$0xf]
        %v866 = vld [vmem:[%s855 + $0x28] sm:$0xf]
        %v867 = vld [vmem:[%s855 + $0x2c] sm:$0xf]
        %v868 = vld [vmem:[%s855 + $0x30] sm:$0xf]
        %v869 = vld [vmem:[%s855 + $0x34] sm:$0xf]
        %v870 = vld [vmem:[%s855 + $0x38] sm:$0xf]
        %v871 = vld [vmem:[%s855 + $0x3c] sm:$0xf]
        %v888 = vunpack.c.l.b16 %v856
        %v889 = vunpack.c.l.b16 %v857
        %v890 = vunpack.c.l.b16 %v858
        %v891 = vunpack.c.l.b16 %v859
        %v892 = vunpack.c.l.b16 %v860
        %v893 = vunpack.c.l.b16 %v861
        %v894 = vunpack.c.l.b16 %v862
        %v895 = vunpack.c.l.b16 %v863
        %v896 = vunpack.c.l.b16 %v864
        %v897 = vunpack.c.l.b16 %v865
        %v898 = vunpack.c.l.b16 %v866
        %v899 = vunpack.c.l.b16 %v867
        %v900 = vunpack.c.l.b16 %v868
        %v901 = vunpack.c.l.b16 %v869
        %v902 = vunpack.c.l.b16 %v870
        %v903 = vunpack.c.l.b16 %v871
        %v904 = vpack.c.b16 %v889, %v888
        %v905 = vpack.c.b16 %v891, %v890
        %v906 = vpack.c.b16 %v893, %v892
        %v907 = vpack.c.b16 %v895, %v894
        %v908 = vpack.c.b16 %v897, %v896
        %v909 = vpack.c.b16 %v899, %v898
        %v910 = vpack.c.b16 %v901, %v900
        %v911 = vpack.c.b16 %v903, %v902
        %920 = vmatprep.subr.bf16.mxu0 0
        %921 = vmatpush1.bf16.msra.mxu0 %v904
        %922 = vmatprep.subr.bf16.mxu0 0
        %923 = vmatpush1.bf16.msra.mxu0 %v905
        %924 = vmatprep.subr.bf16.mxu0 0
        %925 = vmatpush1.bf16.msra.mxu0 %v906
        %926 = vmatprep.subr.bf16.mxu0 0
        %927 = vmatpush1.bf16.msra.mxu0 %v907
        %928 = vmatprep.subr.bf16.mxu0 0
        %929 = vmatpush1.bf16.msra.mxu0 %v908
        %930 = vmatprep.subr.bf16.mxu0 0
        %931 = vmatpush1.bf16.msra.mxu0 %v909
        %932 = vmatprep.subr.bf16.mxu0 0
        %933 = vmatpush1.bf16.msra.mxu0 %v910
        %934 = vmatprep.subr.bf16.mxu0 0
        %935 = vmatpush1.bf16.msra.mxu0 %v911
        %936 = vmatprep.subr.bf16.mxu0 0
        %937 = vmatpush1.bf16.msra.mxu0 0
        %938 = vmatprep.subr.bf16.mxu0 0
        %939 = vmatpush1.bf16.msra.mxu0 0
        %940 = vmatprep.subr.bf16.mxu0 0
        %941 = vmatpush1.bf16.msra.mxu0 0
        %942 = vmatprep.subr.bf16.mxu0 0
        %943 = vmatpush1.bf16.msra.mxu0 0
        %944 = vmatprep.subr.bf16.mxu0 0
        %945 = vmatpush1.bf16.msra.mxu0 0
        %946 = vmatprep.subr.bf16.mxu0 0
        %947 = vmatpush1.bf16.msra.mxu0 0
        %948 = vmatprep.subr.bf16.mxu0 0
        %949 = vmatpush1.bf16.msra.mxu0 0
        %950 = vmatprep.subr.bf16.mxu0 0
        %951 = vmatpush1.bf16.msra.mxu0 0
        %952 = vmatprep.mubr.bf16.mxu0 0
        %953 = vmatmul.mubr.bf16.gmra.mrb[0].mxu0 %v851
        %v954 = vpop.f32.mrb[0].mxu0
        %v955 = vadd.f32 0.0, %v954
        %v956 = vpop.f32.mrb[0].mxu0
        %v957 = vpop.f32.mrb[0].mxu0
        %v958 = vadd.f32 0.0, %v957
        %v959 = vpop.f32.mrb[0].mxu0
        %960 = vmatprep.mubr.bf16.mxu0 0
        %961 = vmatmul.mubr.bf16.gmra.mrb[0].mxu0 %v852
        %v962 = vpop.f32.mrb[0].mxu0
        %v963 = vadd.f32 0.0, %v962
        %v964 = vpop.f32.mrb[0].mxu0
        %v965 = vpop.f32.mrb[0].mxu0
        %v966 = vadd.f32 0.0, %v965
        %v967 = vpop.f32.mrb[0].mxu0
        %968 = vmatprep.mubr.bf16.mxu0 0
        %969 = vmatmul.mubr.bf16.gmra.mrb[0].mxu0 %v853
        %v970 = vpop.f32.mrb[0].mxu0
        %v971 = vadd.f32 0.0, %v970
        %v972 = vpop.f32.mrb[0].mxu0
        %v973 = vpop.f32.mrb[0].mxu0
        %v974 = vadd.f32 0.0, %v973
        %v975 = vpop.f32.mrb[0].mxu0
        %976 = vmatprep.mubr.bf16.mxu0 0
        %977 = vmatmul.mubr.bf16.gmra.mrb[0].mxu0 %v854
        %v978 = vpop.f32.mrb[0].mxu0
        %v979 = vadd.f32 0.0, %v978
        %v980 = vpop.f32.mrb[0].mxu0
        %v981 = vpop.f32.mrb[0].mxu0
        %v982 = vadd.f32 0.0, %v981
        %v983 = vpop.f32.mrb[0].mxu0
        %984 = vdwg.mxu0
        %v1001 = vunpack.c.l.b16 %v629
        %v1002 = vunpack.c.l.b16 %v630
        %v1003 = vunpack.c.l.b16 %v631
        %v1004 = vunpack.c.l.b16 %v632
        %v1005 = vunpack.c.l.b16 %v633
        %v1006 = vunpack.c.l.b16 %v634
        %v1007 = vunpack.c.l.b16 %v635
        %v1008 = vunpack.c.l.b16 %v636
        %v1009 = vunpack.c.l.b16 %v637
        %v1010 = vunpack.c.l.b16 %v638
        %v1011 = vunpack.c.l.b16 %v639
        %v1012 = vunpack.c.l.b16 %v640
        %v1013 = vunpack.c.l.b16 %v641
        %v1014 = vunpack.c.l.b16 %v642
        %v1015 = vunpack.c.l.b16 %v643
        %v1016 = vunpack.c.l.b16 %v644
        %v1017 = vpack.c.b16 %v1002, %v1001
        %v1018 = vpack.c.b16 %v1004, %v1003
        %v1019 = vpack.c.b16 %v1006, %v1005
        %v1020 = vpack.c.b16 %v1008, %v1007
        %v1021 = vpack.c.b16 %v1010, %v1009
        %v1022 = vpack.c.b16 %v1012, %v1011
        %v1023 = vpack.c.b16 %v1014, %v1013
        %v1024 = vpack.c.b16 %v1016, %v1015
        %1033 = vmatprep.subr.bf16.mxu0 0
        %1034 = vmatpush1.bf16.msra.mxu0 %v1017
        %1035 = vmatprep.subr.bf16.mxu0 0
        %1036 = vmatpush1.bf16.msra.mxu0 %v1018
        %1037 = vmatprep.subr.bf16.mxu0 0
        %1038 = vmatpush1.bf16.msra.mxu0 %v1019
        %1039 = vmatprep.subr.bf16.mxu0 0
        %1040 = vmatpush1.bf16.msra.mxu0 %v1020
        %1041 = vmatprep.subr.bf16.mxu0 0
        %1042 = vmatpush1.bf16.msra.mxu0 %v1021
        %1043 = vmatprep.subr.bf16.mxu0 0
        %1044 = vmatpush1.bf16.msra.mxu0 %v1022
        %1045 = vmatprep.subr.bf16.mxu0 0
        %1046 = vmatpush1.bf16.msra.mxu0 %v1023
        %1047 = vmatprep.subr.bf16.mxu0 0
        %1048 = vmatpush1.bf16.msra.mxu0 %v1024
        %1049 = vmatprep.subr.bf16.mxu0 0
        %1050 = vmatpush1.bf16.msra.mxu0 0
        %1051 = vmatprep.subr.bf16.mxu0 0
        %1052 = vmatpush1.bf16.msra.mxu0 0
        %1053 = vmatprep.subr.bf16.mxu0 0
        %1054 = vmatpush1.bf16.msra.mxu0 0
        %1055 = vmatprep.subr.bf16.mxu0 0
        %1056 = vmatpush1.bf16.msra.mxu0 0
        %1057 = vmatprep.subr.bf16.mxu0 0
        %1058 = vmatpush1.bf16.msra.mxu0 0
        %1059 = vmatprep.subr.bf16.mxu0 0
        %1060 = vmatpush1.bf16.msra.mxu0 0
        %1061 = vmatprep.subr.bf16.mxu0 0
        %1062 = vmatpush1.bf16.msra.mxu0 0
        %1063 = vmatprep.subr.bf16.mxu0 0
        %1064 = vmatpush1.bf16.msra.mxu0 0
        %1065 = vmatprep.mubr.bf16.mxu0 0
        %1066 = vmatmul.mubr.bf16.gmra.mrb[0].mxu0 %v625
        %v1067 = vpop.f32.mrb[0].mxu0
        %v1068 = vadd.f32 %v955, %v1067
        %v1069 = vpop.f32.mrb[0].mxu0
        %v1070 = vpop.f32.mrb[0].mxu0
        %v1071 = vadd.f32 %v958, %v1070
        %v1072 = vpop.f32.mrb[0].mxu0
        %1073 = vmatprep.mubr.bf16.mxu0 0
        %1074 = vmatmul.mubr.bf16.gmra.mrb[0].mxu0 %v626
        %v1075 = vpop.f32.mrb[0].mxu0
        %v1076 = vadd.f32 %v963, %v1075
        %v1077 = vpop.f32.mrb[0].mxu0
        %v1078 = vpop.f32.mrb[0].mxu0
        %v1079 = vadd.f32 %v966, %v1078
        %v1080 = vpop.f32.mrb[0].mxu0
        %1081 = vmatprep.mubr.bf16.mxu0 0
        %1082 = vmatmul.mubr.bf16.gmra.mrb[0].mxu0 %v627
        %v1083 = vpop.f32.mrb[0].mxu0
        %v1084 = vadd.f32 %v971, %v1083
        %v1085 = vpop.f32.mrb[0].mxu0
        %v1086 = vpop.f32.mrb[0].mxu0
        %v1087 = vadd.f32 %v974, %v1086
        %v1088 = vpop.f32.mrb[0].mxu0
        %1089 = vmatprep.mubr.bf16.mxu0 0
        %1090 = vmatmul.mubr.bf16.gmra.mrb[0].mxu0 %v628
        %v1091 = vpop.f32.mrb[0].mxu0
        %v1092 = vadd.f32 %v979, %v1091
        %v1093 = vpop.f32.mrb[0].mxu0
        %v1094 = vpop.f32.mrb[0].mxu0
        %v1095 = vadd.f32 %v982, %v1094
        %v1096 = vpop.f32.mrb[0].mxu0
        %1097 = vdwg.mxu0
        %v1098 = vmul.f32 %v1068, 0.5
        %v1099 = vmul.f32 %v1071, 0.5
        %v1100 = vmul.f32 %v1076, 0.5
        %v1101 = vmul.f32 %v1079, 0.5
        %v1102 = vmul.f32 %v1084, 0.5
        %v1103 = vmul.f32 %v1087, 0.5
        %v1104 = vmul.f32 %v1092, 0.5
        %v1105 = vmul.f32 %v1095, 0.5
        %v1106 = vld [vmem:[%s4] sm:$0x1]
        %v1108 = vlaneseq
        %v1109 = vshrl.u32 %v1108, 7
        %v1110 = vsub.s32 0, %v1109
        %v1111 = vrot.slane %v1106, %v1110
        %v1113 = vadd.f32 %v1098, %v1111
        %v1114 = vadd.f32 %v1099, %v1111
        %v1115 = vadd.f32 %v1100, %v1111
        %v1116 = vadd.f32 %v1101, %v1111
        %v1117 = vadd.f32 %v1102, %v1111
        %v1118 = vadd.f32 %v1103, %v1111
        %v1119 = vadd.f32 %v1104, %v1111
        %v1120 = vadd.f32 %v1105, %v1111
        %v1121 = vmax.f32 %v1113, 0.0
        %v1122 = vmax.f32 %v1114, 0.0
        %v1123 = vmax.f32 %v1115, 0.0
        %v1124 = vmax.f32 %v1116, 0.0
        %v1125 = vmax.f32 %v1117, 0.0
        %v1126 = vmax.f32 %v1118, 0.0
        %v1127 = vmax.f32 %v1119, 0.0
        %v1128 = vmax.f32 %v1120, 0.0
        %v1129 = vld [vmem:[%s5] sm:$0xff]
        %v1130 = vld [vmem:[%s5 + $0x8] sm:$0xff]
        %v1131 = vld [vmem:[%s5 + $0x10] sm:$0xff]
        %v1132 = vld [vmem:[%s5 + $0x18] sm:$0xff]
        %v1133 = vld [vmem:[%s6] sm:$0x1]
        %v1135 = vlaneseq
        %v1136 = vshrl.u32 %v1135, 7
        %v1137 = vsub.s32 0, %v1136
        %v1138 = vrot.slane %v1133, %v1137
        %vm1140 = vcmask 261120
        %v1142 = vsel %vm1140, %v1121, 0
        %v1145 = vsel %vm1140, %v1122, 0
        %v1148 = vsel %vm1140, %v1123, 0
        %v1151 = vsel %vm1140, %v1124, 0
        %v1154 = vsel %vm1140, %v1125, 0
        %v1157 = vsel %vm1140, %v1126, 0
        %v1160 = vsel %vm1140, %v1127, 0
        %v1163 = vsel %vm1140, %v1128, 0
        %1165 = vmatprep.subr.mxu0 0.0
        %1166 = vmatpush1.msra.mxu0 %v1129
        %1167 = vmatprep.subr.mxu0 0.0
        %1168 = vmatpush1.msra.mxu0 %v1130
        %1169 = vmatprep.subr.mxu0 0.0
        %1170 = vmatpush1.msra.mxu0 %v1131
        %1171 = vmatprep.subr.mxu0 0.0
        %1172 = vmatpush1.msra.mxu0 %v1132
        %1173 = vmatprep.subr.mxu0 0.0
        %1174 = vmatpush1.msra.mxu0 0.0
        %1175 = vmatprep.subr.mxu0 0.0
        %1176 = vmatpush1.msra.mxu0 0.0
        %1177 = vmatprep.subr.mxu0 0.0
        %1178 = vmatpush1.msra.mxu0 0.0
        %1179 = vmatprep.subr.mxu0 0.0
        %1180 = vmatpush1.msra.mxu0 0.0
        %1181 = vmatprep.subr.mxu0 0.0
        %1182 = vmatpush1.msra.mxu0 0.0
        %1183 = vmatprep.subr.mxu0 0.0
        %1184 = vmatpush1.msra.mxu0 0.0
        %1185 = vmatprep.subr.mxu0 0.0
        %1186 = vmatpush1.msra.mxu0 0.0
        %1187 = vmatprep.subr.mxu0 0.0
        %1188 = vmatpush1.msra.mxu0 0.0
        %1189 = vmatprep.subr.mxu0 0.0
        %1190 = vmatpush1.msra.mxu0 0.0
        %1191 = vmatprep.subr.mxu0 0.0
        %1192 = vmatpush1.msra.mxu0 0.0
        %1193 = vmatprep.subr.mxu0 0.0
        %1194 = vmatpush1.msra.mxu0 0.0
        %1195 = vmatprep.subr.mxu0 0.0
        %1196 = vmatpush1.msra.mxu0 0.0
        %1197 = vmatprep.subr.mxu0 0.0
        %1198 = vmatpush1.msra.mxu0 0.0
        %1199 = vmatprep.subr.mxu0 0.0
        %1200 = vmatpush1.msra.mxu0 0.0
        %1201 = vmatprep.subr.mxu0 0.0
        %1202 = vmatpush1.msra.mxu0 0.0
        %1203 = vmatprep.subr.mxu0 0.0
        %1204 = vmatpush1.msra.mxu0 0.0
        %1205 = vmatprep.subr.mxu0 0.0
        %1206 = vmatpush1.msra.mxu0 0.0
        %1207 = vmatprep.subr.mxu0 0.0
        %1208 = vmatpush1.msra.mxu0 0.0
        %1209 = vmatprep.subr.mxu0 0.0
        %1210 = vmatpush1.msra.mxu0 0.0
        %1211 = vmatprep.subr.mxu0 0.0
        %1212 = vmatpush1.msra.mxu0 0.0
        %1213 = vmatprep.subr.mxu0 0.0
        %1214 = vmatpush1.msra.mxu0 0.0
        %1215 = vmatprep.subr.mxu0 0.0
        %1216 = vmatpush1.msra.mxu0 0.0
        %1217 = vmatprep.subr.mxu0 0.0
        %1218 = vmatpush1.msra.mxu0 0.0
        %1219 = vmatprep.subr.mxu0 0.0
        %1220 = vmatpush1.msra.mxu0 0.0
        %1221 = vmatprep.subr.mxu0 0.0
        %1222 = vmatpush1.msra.mxu0 0.0
        %1223 = vmatprep.subr.mxu0 0.0
        %1224 = vmatpush1.msra.mxu0 0.0
        %1225 = vmatprep.subr.mxu0 0.0
        %1226 = vmatpush1.msra.mxu0 0.0
        %1227 = vmatprep.subr.mxu0 0.0
        %1228 = vmatpush1.msra.mxu0 0.0
        %1229 = vmatprep.mubr.f32.mxu0 0.0
        %1230 = vmatmul.mubr.f32.gmra.mrb[0].mxu0 %v1142
        %v1231 = vpop.f32.mrb[0].mxu0
        %v1232 = vadd.f32 %v1138, %v1231
        %v1233 = vpop.f32.mrb[0].mxu0
        %1234 = vmatprep.mubr.f32.mxu0 0.0
        %1235 = vmatmul.mubr.f32.gmra.mrb[0].mxu0 %v1145
        %v1236 = vpop.f32.mrb[0].mxu0
        %v1237 = vadd.f32 %v1138, %v1236
        %v1238 = vpop.f32.mrb[0].mxu0
        %1239 = vmatprep.mubr.f32.mxu0 0.0
        %1240 = vmatmul.mubr.f32.gmra.mrb[0].mxu0 %v1148
        %v1241 = vpop.f32.mrb[0].mxu0
        %v1242 = vadd.f32 %v1138, %v1241
        %v1243 = vpop.f32.mrb[0].mxu0
        %1244 = vmatprep.mubr.f32.mxu0 0.0
        %1245 = vmatmul.mubr.f32.gmra.mrb[0].mxu0 %v1151
        %v1246 = vpop.f32.mrb[0].mxu0
        %v1247 = vadd.f32 %v1138, %v1246
        %v1248 = vpop.f32.mrb[0].mxu0
        %1249 = vmatprep.mubr.f32.mxu0 0.0
        %1250 = vmatmul.mubr.f32.gmra.mrb[0].mxu0 %v1154
        %v1251 = vpop.f32.mrb[0].mxu0
        %v1252 = vadd.f32 %v1138, %v1251
        %v1253 = vpop.f32.mrb[0].mxu0
        %1254 = vmatprep.mubr.f32.mxu0 0.0
        %1255 = vmatmul.mubr.f32.gmra.mrb[0].mxu0 %v1157
        %v1256 = vpop.f32.mrb[0].mxu0
        %v1257 = vadd.f32 %v1138, %v1256
        %v1258 = vpop.f32.mrb[0].mxu0
        %1259 = vmatprep.mubr.f32.mxu0 0.0
        %1260 = vmatmul.mubr.f32.gmra.mrb[0].mxu0 %v1160
        %v1261 = vpop.f32.mrb[0].mxu0
        %v1262 = vadd.f32 %v1138, %v1261
        %v1263 = vpop.f32.mrb[0].mxu0
        %1264 = vmatprep.mubr.f32.mxu0 0.0
        %1265 = vmatmul.mubr.f32.gmra.mrb[0].mxu0 %v1163
        %v1266 = vpop.f32.mrb[0].mxu0
        %v1267 = vadd.f32 %v1138, %v1266
        %v1268 = vpop.f32.mrb[0].mxu0
        %1269 = vdwg.mxu0
        %1270 = vst [vmem:[%s394] sm:$0xff] %v1232
        %1271 = vst [vmem:[%s394 + $0x8] sm:$0xff] %v1237
        %1272 = vst [vmem:[%s394 + $0x10] sm:$0xff] %v1242
        %1273 = vst [vmem:[%s394 + $0x18] sm:$0xff] %v1247
        %1274 = vst [vmem:[%s394 + $0x20] sm:$0xff] %v1252
        %1275 = vst [vmem:[%s394 + $0x28] sm:$0xff] %v1257
        %1276 = vst [vmem:[%s394 + $0x30] sm:$0xff] %v1262
        %1277 = vst [vmem:[%s394 + $0x38] sm:$0xff] %v1267
        %s1278 = sand.u32 %s186, 1
        %s1279 = scalar_lea.sflag [#allocation4], %s1278
        %s1280 = sand.u32 %s186, 1
        %s1281 = smul.addr %s1280, 64
        %s1282 = scalar_lea.vmem [#allocation3], %s1281
        // Predicated region
        $region90: #{tpu_custom_call.1} parent=84 // pred_check
          %p1283 = pneg %p196
        $region91: #{tpu_custom_call.1} parent=84 // pred_check_branch
          %1285 = sbr.rel (%p1283) target = $region93
        $region92: #{tpu_custom_call.1} parent=84 // pred_region
          %s1286 = smul.u32 8, %s21
          %s1288 = ssub.s32 1024, 1024
          %1289 = vsyncadd %s1279, %s1288
          %s1290 = smul.addr %s1286, 128
          %s1291 = scalar_lea.hbm %s7, %s1290
          %s1292 = sshll.u32 %s1282, 4
          %s1293 = int_to_ptr.vmem [resolvable:$true] %s1292
          %1298 = dma.vmem_to_hbm [thread:$0]  %s1293, 1024, %s1291, %s1279, 128, 128, 8
        $region93: #{tpu_custom_call.1} parent=84 // pred_fallthru
          _
      $region85: #{tpu_custom_call.1} parent=5 // pred_fallthru
        _
      %p1299 = scmp.le.s32.totalorder 2, %s16
      // Predicated region
      $region94: #{tpu_custom_call.1} parent=5 // pred_check
        %p1300 = pneg %p1299
      $region95: #{tpu_custom_call.1} parent=5 // pred_check_branch
        %1302 = sbr.rel (%p1300) target = $region97
      $region96: #{tpu_custom_call.1} parent=5 // pred_region
        %s1303 = ssub.s32 %s16, 2
        // Predicated region
        $region98: #{tpu_custom_call.1} parent=96 // pred_check
          %p1304 = pneg %p202
        $region99: #{tpu_custom_call.1} parent=96 // pred_check_branch
          %1306 = sbr.rel (%p1304) target = $region101
        $region100: #{tpu_custom_call.1} parent=96 // pred_region
          %s1307 = sand.u32 %s187, 1
          %s1308 = scalar_lea.sflag [#allocation4], %s1307
          %s1309 = sand.u32 %s187, 1
          %s1310 = smul.addr %s1309, 64
          %s1311 = scalar_lea.vmem [#allocation3], %s1310
          %1312 = dma.done %s1308, 1024
        $region101: #{tpu_custom_call.1} parent=96 // pred_fallthru
          _
      $region97: #{tpu_custom_call.1} parent=5 // pred_fallthru
        _
    $region6: #{tpu_custom_call.1} parent=1 // loop_footer
      %s20 = sadd.s32 1, %s16
    $region7: #{tpu_custom_call.1} parent=1 // loop_footer_branch
      %15 = sbr.rel target = $region3
    $region8: #{tpu_custom_call.1} parent=1 // loop_exit
      _
    %1313 = vsyncpa [#allocation4], 1
    %s1314 = scalar_lea.sflag [#allocation4], 1
    %1315 = vsyncpa %s1314, 1

</llo_original>
